<compile_context>
chip_gen: v6e
topology: v6e:2x2x1
jax: 0.10.0
libtpu: 0.0.40
codegen_flags: <defaults>
</compile_context>

<pallas_src>
import math
from typing import List, Optional

import jax
import jax.numpy as jnp
import numpy as np
from jax.experimental import pallas as pl
from jax.experimental.pallas import tpu as pltpu


# ------------------------------ helpers ------------------------------

def _round_up(x: int, m: int) -> int:
    return ((x + m - 1) // m) * m


def _halve_tile(tm: int) -> int:
    return max(8, ((tm // 2) // 8) * 8)


def _vmem_capacity_bytes() -> int:
    try:
        cap = int(getattr(pltpu.get_tpu_info(), "vmem_capacity_bytes", 0))
        if cap > 0:
            return cap
    except Exception:
        pass
    return 64 * 1024 * 1024            # conservative default (v7x physical)


def _vmem_budget_bytes() -> int:
    cap = _vmem_capacity_bytes()
    # Leave headroom for compiler-internal scratch:
    # ~54 MiB on v7x (64 MiB physical), ~109 MiB on v5e/v6e (128 MiB).
    return min(int(cap * 0.85), cap - (8 << 20))


def _is_128_mxu_chip() -> bool:
    try:
        kind = jax.devices()[0].device_kind.lower()
        return any(v in kind for v in ("v2", "v3", "v4", "v5"))
    except Exception:
        return False


def _feature_alignment(dim: int) -> int:
    # v6e/v7x MXUs are 2x256x256: align wide layers to 256.  v5e (4x128x128)
    # and small dims stay at 128 (relative padding waste would dominate).
    if dim >= 256 and not _is_128_mxu_chip():
        return 256
    return 128


def _derive_tm(max_rows: int, din: int, dims_pad: List[int],
               weight_bytes: int, x_itemsize: int, vmem_budget: int) -> int:
    """Largest row tile that fits the VMEM budget AND bounds row-padding
    waste to ~25%."""
    act_budget = max(vmem_budget - weight_bytes, 4 << 20)
    # x up to triple-buffered (input dtype), f32 output double-buffered, plus
    # a few live f32/bf16 intermediates of the widest layer.
    per_row = (3 * din * x_itemsize
               + 2 * dims_pad[-1] * 4
               + 6 * max(dims_pad) * 4)
    tm = max(8, min(1024, _round_up(max_rows, 8)))
    while tm > 8 and tm * per_row > act_budget:
        tm = _halve_tile(tm)
    while tm > 8 and _round_up(max_rows, tm) > max(max_rows + 8,
                                                   int(1.25 * max_rows)):
        tm = _halve_tile(tm)
    return tm


# ----------------------------- Pallas kernel -----------------------------

def make_fused_mlp_kernel(num_layers: int):
    """(Linear -> ReLU) x (L-1) -> Linear, matching FCNetwork semantics.

    bf16 MXU operands, f32 accumulation / bias-add / ReLU.
    refs = (x_ref, w0, b0, ..., w_{L-1}, b_{L-1}, o_ref); the network axis is
    squeezed away by the BlockSpecs, so every ref is a 2-D tile.
    """

    def kernel(*refs):
        x_ref, o_ref = refs[0], refs[-1]
        params = refs[1:-1]                          # interleaved (w, b) pairs
        h = x_ref[...].astype(jnp.bfloat16)          # cast in-kernel
        for layer in range(num_layers):
            w = params[2 * layer][...]               # bf16 (din_p, dout_p)
            b = params[2 * layer + 1][...]           # f32  (1, dout_p)
            acc = jnp.dot(h, w, preferred_element_type=jnp.float32) + b
            if layer < num_layers - 1:
                h = jnp.maximum(acc, 0.0).astype(jnp.bfloat16)   # nn.ReLU
            else:
                h = acc
        o_ref[...] = h.astype(o_ref.dtype)

    return kernel


def fused_mlp_pallas(x_stacked: jax.Array,
                     stacked_weights: List[jax.Array],
                     stacked_biases: List[jax.Array],
                     tm: int,
                     vmem_limit: int,
                     use_pipeline_hints: bool = True) -> jax.Array:
    """Run all shared networks' MLPs in one pallas_call.

    x_stacked:          (N_net, rows_pad, din)           input dtype (natural din)
    stacked_weights[l]: (N_net, din_pad_l, dout_pad_l)   bf16
    stacked_biases[l]:  (N_net, 1, dout_pad_l)           f32
    returns:            (N_net, rows_pad, dout_pad_last) f32
    """
    n_net, rows_pad, din = x_stacked.shape
    num_layers = len(stacked_weights)
    dout_pad = stacked_weights[-1].shape[-1]
    assert rows_pad % tm == 0
    row_tiles = rows_pad // tm

    if n_net == 1:
        # Drop the degenerate network axis so the row axis is the one that
        # megacore (v7x, 2 TensorCores) shards.
        grid = (row_tiles,)
        sem = ("parallel",)
        x_map = lambda i: (0, i, 0)
        wb_map = lambda i: (0, 0, 0)
    else:
        # Weights stay resident across the inner (row) axis; only activations
        # stream per step.
        grid = (n_net, row_tiles)
        sem = ("parallel", "parallel")
        x_map = lambda n, i: (n, i, 0)
        wb_map = lambda n, i: (n, 0, 0)

    x_kw, wb_kw = {}, {}
    if use_pipeline_hints:
        # Weights/biases change only when the network axis advances ->
        # single-buffer them (halves resident weight VMEM).  Deepen the
        # activation pipeline when there are enough row tiles to benefit.
        wb_kw = dict(pipeline_mode=pl.Buffered(1))
        if row_tiles >= 3:
            x_kw = dict(pipeline_mode=pl.Buffered(3))

    in_specs = [pl.BlockSpec((None, tm, din), x_map, **x_kw)]
    args = [x_stacked]
    for w, b in zip(stacked_weights, stacked_biases):
        in_specs.append(pl.BlockSpec((None, w.shape[1], w.shape[2]),
                                     wb_map, **wb_kw))
        in_specs.append(pl.BlockSpec((None, 1, b.shape[2]), wb_map, **wb_kw))
        args.append(w)
        args.append(b)

    out_specs = pl.BlockSpec((None, tm, dout_pad), x_map)

    return pl.pallas_call(
        make_fused_mlp_kernel(num_layers),
        out_shape=jax.ShapeDtypeStruct((n_net, rows_pad, dout_pad),
                                       jnp.float32),
        grid=grid,
        in_specs=in_specs,
        out_specs=out_specs,
        compiler_params=pltpu.CompilerParams(
            dimension_semantics=sem,
            vmem_limit_bytes=int(vmem_limit)),
    )(*args)


# ----------------------- MultiAgentSharedNetwork (JAX) -----------------------

class MultiAgentSharedNetworkPallas:
    """Reimplements MultiAgentSharedNetwork forward (use_rnn=False path).

    Parameters are initialized in-script (orthogonal weights with gain
    sqrt(2) and zero biases when use_orthogonal_init, PyTorch-default-style
    uniform weights/biases otherwise).  All shared networks are evaluated by
    a single fused Pallas kernel.
    """

    def __init__(self, input_sizes, hidden_dims, output_sizes, sharing_indices,
                 key, use_orthogonal_init=True):
        assert len(input_sizes) == len(output_sizes)
        self.num_agents = len(input_sizes)
        if sharing_indices is True:
            self.sharing_indices = self.num_agents * [0]
        elif sharing_indices is False:
            self.sharing_indices = list(range(self.num_agents))
        else:
            self.sharing_indices = list(sharing_indices)
        assert len(self.sharing_indices) == self.num_agents

        self.num_networks = 0
        self.agents_by_network = []
        self.network_params = []          # unpadded f32 (weights, biases)
        created = set()
        net_dims = []

        ortho = jax.nn.initializers.orthogonal(scale=math.sqrt(2.0))
        for i in self.sharing_indices:
            if i in created:
                continue
            network_agents = [j for j, idx in enumerate(self.sharing_indices)
                              if idx == i]
            in_sizes = [input_sizes[j] for j in network_agents]
            in_size = in_sizes[0]
            assert all(d == in_size for d in in_sizes)
            out_sizes = [output_sizes[j] for j in network_agents]
            out_size = out_sizes[0]
            assert all(d == out_size for d in out_sizes)

            dims = [in_size] + list(hidden_dims) + [out_size]
            weights, biases = [], []
            for li in range(len(dims) - 1):
                key, wk, bk = jax.random.split(key, 3)
                din, dout = dims[li], dims[li + 1]
                if use_orthogonal_init:
                    w = ortho(wk, (din, dout), jnp.float32)
                    b = jnp.zeros((dout,), jnp.float32)
                else:
                    bound = 1.0 / math.sqrt(din)
                    w = jax.random.uniform(wk, (din, dout), jnp.float32,
                                           -bound, bound)
                    b = jax.random.uniform(bk, (dout,), jnp.float32,
                                           -bound, bound)
                weights.append(w)
                biases.append(b)
            self.network_params.append((weights, biases))
            self.agents_by_network.append(network_agents)
            net_dims.append(dims)
            self.num_networks += 1
            created.add(i)

        # Padded feature dims shared across all networks (for stacking).
        # The input dim stays natural (full-extent block is legal and avoids
        # 8x HBM read inflation); hidden/output dims are lane-dense.
        self.num_layers = len(hidden_dims) + 1
        self.dims_pad = []
        for li in range(self.num_layers + 1):
            dmax = max(d[li] for d in net_dims)
            if li == 0:
                self.dims_pad.append(dmax)
            else:
                self.dims_pad.append(_round_up(dmax, _feature_alignment(dmax)))
        self.net_in_dims = [d[0] for d in net_dims]
        self.net_out_dims = [d[-1] for d in net_dims]

        # Stack zero-padded params: W_l (N, din_p, dout_p) bf16,
        # B_l (N, 1, dout_p) f32.
        self.stacked_weights = []
        self.stacked_biases = []
        for li in range(self.num_layers):
            din_p, dout_p = self.dims_pad[li], self.dims_pad[li + 1]
            ws, bs = [], []
            for weights, biases in self.network_params:
                w, b = weights[li], biases[li]
                ws.append(jnp.pad(w, ((0, din_p - w.shape[0]),
                                      (0, dout_p - w.shape[1])))
                          .astype(jnp.bfloat16))
                bs.append(jnp.pad(b.reshape(1, -1),
                                  ((0, 0), (0, dout_p - b.shape[0])))
                          .astype(jnp.float32))
            self.stacked_weights.append(jnp.stack(ws, axis=0))
            self.stacked_biases.append(jnp.stack(bs, axis=0))

        # Per-network (single-buffered) weight/bias VMEM footprint.
        self.weight_vmem_bytes = sum(
            int(np.prod(w.shape[1:])) * 2 + int(np.prod(b.shape[1:])) * 4
            for w, b in zip(self.stacked_weights, self.stacked_biases))

    def forward(self, inputs: List[jax.Array],
                hiddens: Optional[List[Optional[jax.Array]]] = None):
        assert all(x.ndim == 3 for x in inputs), \
            "Expect each agent input to be 3D (seq_len, batch, input_size)"
        assert hiddens is None or all(h is None for h in hiddens), \
            "FCNetwork path takes no hidden state"
        seq_len, batch_size = inputs[0].shape[0], inputs[0].shape[1]
        assert all(x.shape[0] == seq_len for x in inputs)
        assert all(x.shape[1] == batch_size for x in inputs)

        # Per-network concatenated (along batch) inputs, flattened to rows.
        x2ds, net_rows = [], []
        for agent_indices in self.agents_by_network:
            net_in = jnp.concatenate([inputs[i] for i in agent_indices], axis=1)
            S, Bn, Din = net_in.shape
            x2ds.append(net_in.reshape(S * Bn, Din))
            net_rows.append(S * Bn)
        max_rows = max(net_rows)

        din = self.dims_pad[0]                 # natural (un-padded) input dim
        x_dtype = inputs[0].dtype
        x_itemsize = jnp.dtype(x_dtype).itemsize
        vmem_budget = _vmem_budget_bytes()
        tm = _derive_tm(max_rows, din, self.dims_pad, self.weight_vmem_bytes,
                        x_itemsize, vmem_budget)
        rows_pad = _round_up(max_rows, tm)

        # One preallocated slab in the caller's dtype (cast to bf16 happens
        # inside the kernel); each network's rows are placed with a single
        # dynamic_update_slice (in-place in XLA) — no pad/stack/astype chain.
        # TODO(synk): heterogeneous per-network row counts are still padded to
        # the global max; a PrefetchScalarGridSpec with per-network tile
        # counts could skip all-padding tiles entirely.
        x_stacked = jnp.zeros((self.num_networks, rows_pad, din), x_dtype)
        for n, x2d in enumerate(x2ds):
            x_stacked = jax.lax.dynamic_update_slice(
                x_stacked, x2d.astype(x_dtype)[None], (n, 0, 0))

        dout_pad = self.dims_pad[-1]
        act_bytes = tm * (3 * din * x_itemsize + 2 * dout_pad * 4
                          + 6 * max(self.dims_pad) * 4)
        footprint = self.weight_vmem_bytes + act_bytes
        vmem_limit = min(vmem_budget, max(int(1.25 * footprint), 32 << 20))

        try:
            y_stacked = fused_mlp_pallas(x_stacked, self.stacked_weights,
                                         self.stacked_biases, tm, vmem_limit,
                                         use_pipeline_hints=True)
            jax.block_until_ready(y_stacked)
        except Exception:
            # pipeline_mode hints unsupported on this jax/libtpu -> fall back
            # to default double-buffered specs.
            y_stacked = fused_mlp_pallas(x_stacked, self.stacked_weights,
                                         self.stacked_biases, tm, vmem_limit,
                                         use_pipeline_hints=False)

        # Slice padding off and split back into per-agent chunks.  Output is
        # f32 for parity with the f32 PyTorch reference model.
        network_outs = []
        for n, agent_indices in enumerate(self.agents_by_network):
            rows, dout = net_rows[n], self.net_out_dims[n]
            Bn = len(agent_indices) * batch_size
            y = y_stacked[n, :rows, :dout].reshape(seq_len, Bn, dout)
            network_outs.append([y[:, k * batch_size:(k + 1) * batch_size, :]
                                 for k in range(len(agent_indices))])

        # Reassemble per-agent outputs in original agent order.
        agent_outputs, agent_hiddens = [], []
        created_order = {}
        for i in self.sharing_indices:
            if i not in created_order:
                created_order[i] = len(created_order)
        idx_by_network = [0] * self.num_networks
        for share_idx in self.sharing_indices:
            net_pos = created_order[share_idx]
            k = idx_by_network[net_pos]
            agent_outputs.append(network_outs[net_pos][k])
            agent_hiddens.append(None)          # FCNetwork returns None hidden
            idx_by_network[net_pos] += 1
        return agent_outputs, agent_hiddens

    def init_hiddens(self, batch_size):
        return [None for _ in range(self.num_agents)]


# --------------------------- reference (pure JAX) ---------------------------

def mlp_ref(x2d, weights, biases, emulate_bf16):
    """Pure-JAX reference.  With emulate_bf16=True this reproduces the
    kernel's numerics (bf16 MXU operands, f32 accumulate / bias / ReLU)."""
    def q(a):
        return a.astype(jnp.bfloat16).astype(jnp.float32) if emulate_bf16 else a
    h = q(x2d.astype(jnp.float32))
    for li, (w, b) in enumerate(zip(weights, biases)):
        h = h @ q(w) + b
        if li < len(weights) - 1:
            h = q(jnp.maximum(h, 0.0))
    return h


def check_model(model, inputs, batch_size, seq_len, output_sizes):
    outs, hids = model.forward(inputs)
    outs = [jax.block_until_ready(o) for o in outs]
    created_order = {}
    for i in model.sharing_indices:
        if i not in created_order:
            created_order[i] = len(created_order)
    idx_by_net = [0] * model.num_networks
    for a, share_idx in enumerate(model.sharing_indices):
        net_pos = created_order[share_idx]
        agents = model.agents_by_network[net_pos]
        net_in = jnp.concatenate([inputs[i] for i in agents], axis=1)
        S, Bn, Din = net_in.shape
        weights, biases = model.network_params[net_pos]
        k = idx_by_net[net_pos]
        idx_by_net[net_pos] += 1
        # Tight check vs bf16-emulated reference; loose check vs pure-f32 ref.
        for emulate, rtol, atol in ((True, 2e-3, 2e-3), (False, 5e-2, 5e-2)):
            ref = mlp_ref(net_in.reshape(S * Bn, Din), weights, biases, emulate)
            ref = ref.reshape(S, Bn, -1)[:, k * batch_size:(k + 1) * batch_size, :]
            np.testing.assert_allclose(np.asarray(outs[a]), np.asarray(ref),
                                       rtol=rtol, atol=atol)
        assert outs[a].shape == (seq_len, batch_size, output_sizes[a])
        assert hids[a] is None
    return outs


# ------------------------------------ main ------------------------------------

if __name__ == "__main__":
    key = jax.random.PRNGKey(0)

    # Small config: 3 agents, agents 0 & 1 share a network, agent 2 has its own.
    num_agents = 3
    sharing_indices = [0, 0, 1]
    input_sizes = [16, 16, 16]
    hidden_dims = [32, 32]
    output_sizes = [8, 8, 8]
    seq_len, batch = 8, 2

    key, pkey = jax.random.split(key)
    model = MultiAgentSharedNetworkPallas(
        input_sizes, hidden_dims, output_sizes, sharing_indices,
        key=pkey, use_orthogonal_init=True)

    inputs = []
    for a in range(num_agents):
        key, ik = jax.random.split(key)
        inputs.append(jax.random.normal(
            ik, (seq_len, batch, input_sizes[a]), jnp.float32))

    check_model(model, inputs, batch, seq_len, output_sizes)

    # Second check with non-orthogonal init (nonzero biases) to exercise the
    # in-kernel bias-broadcast path.
    key, pkey2 = jax.random.split(key)
    model_b = MultiAgentSharedNetworkPallas(
        input_sizes, hidden_dims, output_sizes, sharing_indices,
        key=pkey2, use_orthogonal_init=False)
    check_model(model_b, inputs, batch, seq_len, output_sizes)

    print("KERNEL_OK")
</pallas_src>

<mosaic_0001>
module attributes {stable_mosaic.version = 11 : i64} {
  func.func @kernel(%arg0: i32, %arg1: i32, %arg2: memref<1x32x16xf32, #tpu.memory_space<vmem>>, %arg3: memref<1x16x128xbf16, #tpu.memory_space<vmem>>, %arg4: memref<1x1x128xf32, #tpu.memory_space<vmem>>, %arg5: memref<1x128x128xbf16, #tpu.memory_space<vmem>>, %arg6: memref<1x1x128xf32, #tpu.memory_space<vmem>>, %arg7: memref<1x128x128xbf16, #tpu.memory_space<vmem>>, %arg8: memref<1x1x128xf32, #tpu.memory_space<vmem>>, %arg9: memref<1x32x128xf32, #tpu.memory_space<vmem>>) attributes {dimension_semantics = [#tpu.dimension_semantics<parallel>, #tpu.dimension_semantics<parallel>], iteration_bounds = array<i64: 2, 1>, scalar_prefetch = 0 : i64, scratch_operands = 0 : i64, tpu.core_type = #tpu.core_type<tc>, window_params = [{transform_indices = @transform_0, window_bounds = array<i64: 1, 32, 16>}, {pipeline_mode = #tpu.pipeline_mode<synchronous>, transform_indices = @transform_1, window_bounds = array<i64: 1, 16, 128>}, {pipeline_mode = #tpu.pipeline_mode<synchronous>, transform_indices = @transform_2, window_bounds = array<i64: 1, 1, 128>}, {pipeline_mode = #tpu.pipeline_mode<synchronous>, transform_indices = @transform_3, window_bounds = array<i64: 1, 128, 128>}, {pipeline_mode = #tpu.pipeline_mode<synchronous>, transform_indices = @transform_4, window_bounds = array<i64: 1, 1, 128>}, {pipeline_mode = #tpu.pipeline_mode<synchronous>, transform_indices = @transform_5, window_bounds = array<i64: 1, 128, 128>}, {pipeline_mode = #tpu.pipeline_mode<synchronous>, transform_indices = @transform_6, window_bounds = array<i64: 1, 1, 128>}, {transform_indices = @transform_7, window_bounds = array<i64: 1, 32, 128>}]} {
    %c0 = arith.constant 0 : index
    %c0_0 = arith.constant 0 : index
    %c0_1 = arith.constant 0 : index
    %0 = vector.load %arg2[%c0, %c0_0, %c0_1] : memref<1x32x16xf32, #tpu.memory_space<vmem>>, vector<1x32x16xf32>
    %1 = vector.shape_cast %0 : vector<1x32x16xf32> to vector<32x16xf32>
    %2 = arith.truncf %1 : vector<32x16xf32> to vector<32x16xbf16>
    %c0_2 = arith.constant 0 : index
    %c0_3 = arith.constant 0 : index
    %c0_4 = arith.constant 0 : index
    %3 = vector.load %arg3[%c0_2, %c0_3, %c0_4] : memref<1x16x128xbf16, #tpu.memory_space<vmem>>, vector<1x16x128xbf16>
    %4 = vector.shape_cast %3 : vector<1x16x128xbf16> to vector<16x128xbf16>
    %c0_5 = arith.constant 0 : index
    %c0_6 = arith.constant 0 : index
    %c0_7 = arith.constant 0 : index
    %5 = vector.load %arg4[%c0_5, %c0_6, %c0_7] : memref<1x1x128xf32, #tpu.memory_space<vmem>>, vector<1x1x128xf32>
    %6 = vector.shape_cast %5 : vector<1x1x128xf32> to vector<1x128xf32>
    %cst = arith.constant dense<0.000000e+00> : vector<32x128xf32>
    %7 = tpu.matmul %2, %4, %cst {dimension_numbers = #tpu.dot_dimension_numbers<[1], [0], [0], [1], [0, 0, 1, 1], [], []>} : vector<32x16xbf16>, vector<16x128xbf16>, vector<32x128xf32> -> vector<32x128xf32>
    %8 = vector.broadcast %6 : vector<1x128xf32> to vector<32x128xf32>
    %9 = arith.addf %7, %8 : vector<32x128xf32>
    %cst_8 = arith.constant 0.000000e+00 : f32
    %10 = vector.broadcast %cst_8 : f32 to vector<32x128xf32>
    %11 = arith.maximumf %9, %10 : vector<32x128xf32>
    %12 = arith.truncf %11 : vector<32x128xf32> to vector<32x128xbf16>
    %c0_9 = arith.constant 0 : index
    %c0_10 = arith.constant 0 : index
    %c0_11 = arith.constant 0 : index
    %13 = vector.load %arg5[%c0_9, %c0_10, %c0_11] : memref<1x128x128xbf16, #tpu.memory_space<vmem>>, vector<1x128x128xbf16>
    %14 = vector.shape_cast %13 : vector<1x128x128xbf16> to vector<128x128xbf16>
    %c0_12 = arith.constant 0 : index
    %c0_13 = arith.constant 0 : index
    %c0_14 = arith.constant 0 : index
    %15 = vector.load %arg6[%c0_12, %c0_13, %c0_14] : memref<1x1x128xf32, #tpu.memory_space<vmem>>, vector<1x1x128xf32>
    %16 = vector.shape_cast %15 : vector<1x1x128xf32> to vector<1x128xf32>
    %cst_15 = arith.constant dense<0.000000e+00> : vector<32x128xf32>
    %17 = tpu.matmul %12, %14, %cst_15 {dimension_numbers = #tpu.dot_dimension_numbers<[1], [0], [0], [1], [0, 0, 1, 1], [], []>} : vector<32x128xbf16>, vector<128x128xbf16>, vector<32x128xf32> -> vector<32x128xf32>
    %18 = vector.broadcast %16 : vector<1x128xf32> to vector<32x128xf32>
    %19 = arith.addf %17, %18 : vector<32x128xf32>
    %cst_16 = arith.constant 0.000000e+00 : f32
    %20 = vector.broadcast %cst_16 : f32 to vector<32x128xf32>
    %21 = arith.maximumf %19, %20 : vector<32x128xf32>
    %22 = arith.truncf %21 : vector<32x128xf32> to vector<32x128xbf16>
    %c0_17 = arith.constant 0 : index
    %c0_18 = arith.constant 0 : index
    %c0_19 = arith.constant 0 : index
    %23 = vector.load %arg7[%c0_17, %c0_18, %c0_19] : memref<1x128x128xbf16, #tpu.memory_space<vmem>>, vector<1x128x128xbf16>
    %24 = vector.shape_cast %23 : vector<1x128x128xbf16> to vector<128x128xbf16>
    %c0_20 = arith.constant 0 : index
    %c0_21 = arith.constant 0 : index
    %c0_22 = arith.constant 0 : index
    %25 = vector.load %arg8[%c0_20, %c0_21, %c0_22] : memref<1x1x128xf32, #tpu.memory_space<vmem>>, vector<1x1x128xf32>
    %26 = vector.shape_cast %25 : vector<1x1x128xf32> to vector<1x128xf32>
    %cst_23 = arith.constant dense<0.000000e+00> : vector<32x128xf32>
    %27 = tpu.matmul %22, %24, %cst_23 {dimension_numbers = #tpu.dot_dimension_numbers<[1], [0], [0], [1], [0, 0, 1, 1], [], []>} : vector<32x128xbf16>, vector<128x128xbf16>, vector<32x128xf32> -> vector<32x128xf32>
    %28 = vector.broadcast %26 : vector<1x128xf32> to vector<32x128xf32>
    %29 = arith.addf %27, %28 : vector<32x128xf32>
    %c0_24 = arith.constant 0 : index
    %c0_25 = arith.constant 0 : index
    %c0_26 = arith.constant 0 : index
    %30 = vector.load %arg9[%c0_24, %c0_25, %c0_26] : memref<1x32x128xf32, #tpu.memory_space<vmem>>, vector<1x32x128xf32>
    %31 = vector.shape_cast %30 : vector<1x32x128xf32> to vector<32x128xf32>
    %32 = vector.shape_cast %29 : vector<32x128xf32> to vector<1x32x128xf32>
    tpu.vector_store %arg9[%c0_24, %c0_25, %c0_26], %32 {strides = array<i32>} : memref<1x32x128xf32, #tpu.memory_space<vmem>>, vector<1x32x128xf32>,
    return
  }
  func.func @transform_0(%arg0: i32, %arg1: i32) -> (i32, i32, i32) {
    %c0_i32 = arith.constant 0 : i32
    %c0_i32_0 = arith.constant 0 : i32
    return %arg0, %arg1, %c0_i32 : i32, i32, i32
  }
  func.func @transform_1(%arg0: i32, %arg1: i32) -> (i32, i32, i32) {
    %c0_i32 = arith.constant 0 : i32
    %c0_i32_0 = arith.constant 0 : i32
    %c0_i32_1 = arith.constant 0 : i32
    return %arg0, %c0_i32, %c0_i32_0 : i32, i32, i32
  }
  func.func @transform_2(%arg0: i32, %arg1: i32) -> (i32, i32, i32) {
    %c0_i32 = arith.constant 0 : i32
    %c0_i32_0 = arith.constant 0 : i32
    %c0_i32_1 = arith.constant 0 : i32
    return %arg0, %c0_i32, %c0_i32_0 : i32, i32, i32
  }
  func.func @transform_3(%arg0: i32, %arg1: i32) -> (i32, i32, i32) {
    %c0_i32 = arith.constant 0 : i32
    %c0_i32_0 = arith.constant 0 : i32
    %c0_i32_1 = arith.constant 0 : i32
    return %arg0, %c0_i32, %c0_i32_0 : i32, i32, i32
  }
  func.func @transform_4(%arg0: i32, %arg1: i32) -> (i32, i32, i32) {
    %c0_i32 = arith.constant 0 : i32
    %c0_i32_0 = arith.constant 0 : i32
    %c0_i32_1 = arith.constant 0 : i32
    return %arg0, %c0_i32, %c0_i32_0 : i32, i32, i32
  }
  func.func @transform_5(%arg0: i32, %arg1: i32) -> (i32, i32, i32) {
    %c0_i32 = arith.constant 0 : i32
    %c0_i32_0 = arith.constant 0 : i32
    %c0_i32_1 = arith.constant 0 : i32
    return %arg0, %c0_i32, %c0_i32_0 : i32, i32, i32
  }
  func.func @transform_6(%arg0: i32, %arg1: i32) -> (i32, i32, i32) {
    %c0_i32 = arith.constant 0 : i32
    %c0_i32_0 = arith.constant 0 : i32
    %c0_i32_1 = arith.constant 0 : i32
    return %arg0, %c0_i32, %c0_i32_0 : i32, i32, i32
  }
  func.func @transform_7(%arg0: i32, %arg1: i32) -> (i32, i32, i32) {
    %c0_i32 = arith.constant 0 : i32
    %c0_i32_0 = arith.constant 0 : i32
    return %arg0, %arg1, %c0_i32 : i32, i32, i32
  }
}

module attributes {stable_mosaic.version = 11 : i64} {
  func.func @kernel(%arg0: i32, %arg1: i32, %arg2: memref<1x32x16xf32, #tpu.memory_space<vmem>>, %arg3: memref<1x16x128xbf16, #tpu.memory_space<vmem>>, %arg4: memref<1x1x128xf32, #tpu.memory_space<vmem>>, %arg5: memref<1x128x128xbf16, #tpu.memory_space<vmem>>, %arg6: memref<1x1x128xf32, #tpu.memory_space<vmem>>, %arg7: memref<1x128x128xbf16, #tpu.memory_space<vmem>>, %arg8: memref<1x1x128xf32, #tpu.memory_space<vmem>>, %arg9: memref<1x32x128xf32, #tpu.memory_space<vmem>>) attributes {dimension_semantics = [#tpu.dimension_semantics<parallel>, #tpu.dimension_semantics<parallel>], iteration_bounds = array<i64: 2, 1>, scalar_prefetch = 0 : i64, scratch_operands = 0 : i64, tpu.core_type = #tpu.core_type<tc>, window_params = [{transform_indices = @transform_0, window_bounds = array<i64: 1, 32, 16>}, {transform_indices = @transform_1, window_bounds = array<i64: 1, 16, 128>}, {transform_indices = @transform_2, window_bounds = array<i64: 1, 1, 128>}, {transform_indices = @transform_3, window_bounds = array<i64: 1, 128, 128>}, {transform_indices = @transform_4, window_bounds = array<i64: 1, 1, 128>}, {transform_indices = @transform_5, window_bounds = array<i64: 1, 128, 128>}, {transform_indices = @transform_6, window_bounds = array<i64: 1, 1, 128>}, {transform_indices = @transform_7, window_bounds = array<i64: 1, 32, 128>}]} {
    %c0 = arith.constant 0 : index
    %c0_0 = arith.constant 0 : index
    %c0_1 = arith.constant 0 : index
    %0 = vector.load %arg2[%c0, %c0_0, %c0_1] : memref<1x32x16xf32, #tpu.memory_space<vmem>>, vector<1x32x16xf32>
    %1 = vector.shape_cast %0 : vector<1x32x16xf32> to vector<32x16xf32>
    %2 = arith.truncf %1 : vector<32x16xf32> to vector<32x16xbf16>
    %c0_2 = arith.constant 0 : index
    %c0_3 = arith.constant 0 : index
    %c0_4 = arith.constant 0 : index
    %3 = vector.load %arg3[%c0_2, %c0_3, %c0_4] : memref<1x16x128xbf16, #tpu.memory_space<vmem>>, vector<1x16x128xbf16>
    %4 = vector.shape_cast %3 : vector<1x16x128xbf16> to vector<16x128xbf16>
    %c0_5 = arith.constant 0 : index
    %c0_6 = arith.constant 0 : index
    %c0_7 = arith.constant 0 : index
    %5 = vector.load %arg4[%c0_5, %c0_6, %c0_7] : memref<1x1x128xf32, #tpu.memory_space<vmem>>, vector<1x1x128xf32>
    %6 = vector.shape_cast %5 : vector<1x1x128xf32> to vector<1x128xf32>
    %cst = arith.constant dense<0.000000e+00> : vector<32x128xf32>
    %7 = tpu.matmul %2, %4, %cst {dimension_numbers = #tpu.dot_dimension_numbers<[1], [0], [0], [1], [0, 0, 1, 1], [], []>} : vector<32x16xbf16>, vector<16x128xbf16>, vector<32x128xf32> -> vector<32x128xf32>
    %8 = vector.broadcast %6 : vector<1x128xf32> to vector<32x128xf32>
    %9 = arith.addf %7, %8 : vector<32x128xf32>
    %cst_8 = arith.constant 0.000000e+00 : f32
    %10 = vector.broadcast %cst_8 : f32 to vector<32x128xf32>
    %11 = arith.maximumf %9, %10 : vector<32x128xf32>
    %12 = arith.truncf %11 : vector<32x128xf32> to vector<32x128xbf16>
    %c0_9 = arith.constant 0 : index
    %c0_10 = arith.constant 0 : index
    %c0_11 = arith.constant 0 : index
    %13 = vector.load %arg5[%c0_9, %c0_10, %c0_11] : memref<1x128x128xbf16, #tpu.memory_space<vmem>>, vector<1x128x128xbf16>
    %14 = vector.shape_cast %13 : vector<1x128x128xbf16> to vector<128x128xbf16>
    %c0_12 = arith.constant 0 : index
    %c0_13 = arith.constant 0 : index
    %c0_14 = arith.constant 0 : index
    %15 = vector.load %arg6[%c0_12, %c0_13, %c0_14] : memref<1x1x128xf32, #tpu.memory_space<vmem>>, vector<1x1x128xf32>
    %16 = vector.shape_cast %15 : vector<1x1x128xf32> to vector<1x128xf32>
    %cst_15 = arith.constant dense<0.000000e+00> : vector<32x128xf32>
    %17 = tpu.matmul %12, %14, %cst_15 {dimension_numbers = #tpu.dot_dimension_numbers<[1], [0], [0], [1], [0, 0, 1, 1], [], []>} : vector<32x128xbf16>, vector<128x128xbf16>, vector<32x128xf32> -> vector<32x128xf32>
    %18 = vector.broadcast %16 : vector<1x128xf32> to vector<32x128xf32>
    %19 = arith.addf %17, %18 : vector<32x128xf32>
    %cst_16 = arith.constant 0.000000e+00 : f32
    %20 = vector.broadcast %cst_16 : f32 to vector<32x128xf32>
    %21 = arith.maximumf %19, %20 : vector<32x128xf32>
    %22 = arith.truncf %21 : vector<32x128xf32> to vector<32x128xbf16>
    %c0_17 = arith.constant 0 : index
    %c0_18 = arith.constant 0 : index
    %c0_19 = arith.constant 0 : index
    %23 = vector.load %arg7[%c0_17, %c0_18, %c0_19] : memref<1x128x128xbf16, #tpu.memory_space<vmem>>, vector<1x128x128xbf16>
    %24 = vector.shape_cast %23 : vector<1x128x128xbf16> to vector<128x128xbf16>
    %c0_20 = arith.constant 0 : index
    %c0_21 = arith.constant 0 : index
    %c0_22 = arith.constant 0 : index
    %25 = vector.load %arg8[%c0_20, %c0_21, %c0_22] : memref<1x1x128xf32, #tpu.memory_space<vmem>>, vector<1x1x128xf32>
    %26 = vector.shape_cast %25 : vector<1x1x128xf32> to vector<1x128xf32>
    %cst_23 = arith.constant dense<0.000000e+00> : vector<32x128xf32>
    %27 = tpu.matmul %22, %24, %cst_23 {dimension_numbers = #tpu.dot_dimension_numbers<[1], [0], [0], [1], [0, 0, 1, 1], [], []>} : vector<32x128xbf16>, vector<128x128xbf16>, vector<32x128xf32> -> vector<32x128xf32>
    %28 = vector.broadcast %26 : vector<1x128xf32> to vector<32x128xf32>
    %29 = arith.addf %27, %28 : vector<32x128xf32>
    %c0_24 = arith.constant 0 : index
    %c0_25 = arith.constant 0 : index
    %c0_26 = arith.constant 0 : index
    %30 = vector.load %arg9[%c0_24, %c0_25, %c0_26] : memref<1x32x128xf32, #tpu.memory_space<vmem>>, vector<1x32x128xf32>
    %31 = vector.shape_cast %30 : vector<1x32x128xf32> to vector<32x128xf32>
    %32 = vector.shape_cast %29 : vector<32x128xf32> to vector<1x32x128xf32>
    tpu.vector_store %arg9[%c0_24, %c0_25, %c0_26], %32 {strides = array<i32>} : memref<1x32x128xf32, #tpu.memory_space<vmem>>, vector<1x32x128xf32>,
    return
  }
  func.func @transform_0(%arg0: i32, %arg1: i32) -> (i32, i32, i32) {
    %c0_i32 = arith.constant 0 : i32
    %c0_i32_0 = arith.constant 0 : i32
    return %arg0, %arg1, %c0_i32 : i32, i32, i32
  }
  func.func @transform_1(%arg0: i32, %arg1: i32) -> (i32, i32, i32) {
    %c0_i32 = arith.constant 0 : i32
    %c0_i32_0 = arith.constant 0 : i32
    %c0_i32_1 = arith.constant 0 : i32
    return %arg0, %c0_i32, %c0_i32_0 : i32, i32, i32
  }
  func.func @transform_2(%arg0: i32, %arg1: i32) -> (i32, i32, i32) {
    %c0_i32 = arith.constant 0 : i32
    %c0_i32_0 = arith.constant 0 : i32
    %c0_i32_1 = arith.constant 0 : i32
    return %arg0, %c0_i32, %c0_i32_0 : i32, i32, i32
  }
  func.func @transform_3(%arg0: i32, %arg1: i32) -> (i32, i32, i32) {
    %c0_i32 = arith.constant 0 : i32
    %c0_i32_0 = arith.constant 0 : i32
    %c0_i32_1 = arith.constant 0 : i32
    return %arg0, %c0_i32, %c0_i32_0 : i32, i32, i32
  }
  func.func @transform_4(%arg0: i32, %arg1: i32) -> (i32, i32, i32) {
    %c0_i32 = arith.constant 0 : i32
    %c0_i32_0 = arith.constant 0 : i32
    %c0_i32_1 = arith.constant 0 : i32
    return %arg0, %c0_i32, %c0_i32_0 : i32, i32, i32
  }
  func.func @transform_5(%arg0: i32, %arg1: i32) -> (i32, i32, i32) {
    %c0_i32 = arith.constant 0 : i32
    %c0_i32_0 = arith.constant 0 : i32
    %c0_i32_1 = arith.constant 0 : i32
    return %arg0, %c0_i32, %c0_i32_0 : i32, i32, i32
  }
  func.func @transform_6(%arg0: i32, %arg1: i32) -> (i32, i32, i32) {
    %c0_i32 = arith.constant 0 : i32
    %c0_i32_0 = arith.constant 0 : i32
    %c0_i32_1 = arith.constant 0 : i32
    return %arg0, %c0_i32, %c0_i32_0 : i32, i32, i32
  }
  func.func @transform_7(%arg0: i32, %arg1: i32) -> (i32, i32, i32) {
    %c0_i32 = arith.constant 0 : i32
    %c0_i32_0 = arith.constant 0 : i32
    return %arg0, %arg1, %c0_i32 : i32, i32, i32
  }
}

</mosaic_0001>

<llo_original>
// kernel: tpu_custom_call.1
$region0: #{tpu_custom_call.1}
  #allocation0 [shape = 'u32[]', space=smem, size = 0x4, offset = 0x4, fixed_abs, tag = 'smem constant byte address 0x4 - core index']
  #allocation1 [shape = 'u32[144,128]{1,0:T(1,128)}', space=vmem, size = 0x12000, scoped, tag = 'internal scratch']
  %s0 = inlined_call_operand.vmem [shape: f32[2,32,16], index: 0, kind: input, shape index: {}]
  %s1 = inlined_call_operand.vmem [shape: bf16[2,16,128], index: 1, kind: input, shape index: {}]
  %s2 = inlined_call_operand.vmem [shape: f32[2,1,128], index: 2, kind: input, shape index: {}]
  %s3 = inlined_call_operand.hbm [shape: bf16[2,128,128], index: 3, kind: input, shape index: {}]
  %s4 = inlined_call_operand.vmem [shape: f32[2,1,128], index: 4, kind: input, shape index: {}]
  %s5 = inlined_call_operand.hbm [shape: bf16[2,128,128], index: 5, kind: input, shape index: {}]
  %s6 = inlined_call_operand.vmem [shape: f32[2,1,128], index: 6, kind: input, shape index: {}]
  %s7 = inlined_call_operand.hbm [shape: f32[2,32,128], index: 7, kind: output, shape index: {}]
  %s8 = sld [smem:[#allocation0]]
  $region69: #{tpu_custom_call.1} parent=0
    _
  %s10 = ssub.s32 1, %s8
  %s11 = scalar_select 0, %s10, %s8
  $region1: #{tpu_custom_call.1} parent=0
    #allocation2 [shape = 'u8[32768]{0}', space=vmem, size = 0x8000, scoped, tag = 'input window, operand 3, single buffered']
    #allocation3 [shape = 's32[2]{0}', space=sflag, size = 0x8, scoped, tag = 'scoped memory for tpu_custom_call.1']
    #allocation4 [shape = 's32[2]{0}', space=sflag, size = 0x8, scoped, tag = 'scoped memory for tpu_custom_call.1']
    #allocation5 [shape = 'u8[32768]{0}', space=vmem, size = 0x8000, scoped, tag = 'input window, operand 5, single buffered']
    #allocation6 [shape = 's32[1]{0}', space=sflag, size = 0x4, scoped, tag = 'scoped memory for tpu_custom_call.1']
    #allocation7 [shape = 'u8[32768]{0}', space=vmem, size = 0x8000, scoped, tag = 'output window, operand 0']
    %12 = vsyncpa [#allocation3], 0
    %13 = vsyncpa [#allocation6], 0
    %14 = vsyncpa [#allocation4], 0
    %s15 = scalar_lea.sflag [#allocation4], 1
    %16 = vsyncpa %s15, 0
    loop: start=0, step=1, limit=4
    $region2: #{tpu_custom_call.1} parent=1 // loop_pre_header
      _
    $region3: #{tpu_custom_call.1} parent=1 // loop_header
      %s18 = sphi 0, %s22
      %p19 = scmp.ge.s32.totalorder %s18, 4
      %s25 = sphi 0, %s37
      %s26 = sphi 0, %s33
      %s27 = sphi 0, %s25
      %s28 = sphi 0, %s26
      %s29 = sphi 0, %s27
      %s30 = sphi 0, %s28
      %s42 = sphi 0, %s44
      %s45 = sphi 0, %s42
      %s46 = sphi 0, %s45
      %s62 = sphi 0, %s46
      %s68 = sphi 0, %s70
      %s71 = sphi 0, %s68
      %s72 = sphi 0, %s71
      %s88 = sphi 0, %s72
      %s94 = sphi 0, %s96
      %s97 = sphi 0, %s94
      %s98 = sphi 0, %s97
      %s114 = sphi 0, %s98
      %s120 = sphi 0, %s122
      %s123 = sphi 0, %s120
      %s124 = sphi 0, %s123
      %s140 = sphi 0, %s124
      %s146 = sphi 0, %s148
      %s149 = sphi 0, %s146
      %s150 = sphi 0, %s149
      %s166 = sphi 0, %s150
      %s172 = sphi 0, %s174
      %s175 = sphi 0, %s172
      %s176 = sphi 0, %s175
      %s192 = sphi 0, %s176
      %s198 = sphi 0, %s200
      %s201 = sphi 0, %s198
      %s202 = sphi 0, %s201
      %s218 = sphi 0, %s202
      %s226 = sphi 0, %s228
      %s229 = sphi 0, %s226
      %s230 = sphi 0, %s229
      %s246 = sphi 0, %s230
    $region4: #{tpu_custom_call.1} parent=1 // loop_header_branch
      %21 = sbr.rel (%p19) target = $region8
    $region5: #{tpu_custom_call.1} parent=1 // loop_body
      %s23 = ssub.s32 %s18, 1
      %s24 = ssub.s32 %s18, 2
      %s31 = sadd.s32 1, %s26
      %p32 = scmp.ge.s32.totalorder %s31, 1
      %s33 = scalar_select %p32, 0, %s31
      %s34 = sadd.s32 1, %s25
      %s35 = scalar_select %p32, %s34, %s25
      %p36 = scmp.ge.s32.totalorder %s35, 2
      %s37 = scalar_select %p36, 0, %s35
      %s38 = ssub.s32 %s25, %s37
      %s39 = ssub.s32 %s26, %s33
      %s40 = sor.u32 %s38, %s39
      %p41 = scmp.eq.s32.totalorder %s40, 0
      %s43 = sadd.s32 %s42, 1
      %s44 = scalar_select %p41, %s42, %s43
      %p47 = pneg %p41
      %p48 = scmp.eq.s32.totalorder %s18, 1
      %p49 = por %p47, %p48
      %p50 = scmp.ne.s32.totalorder %s42, %s45
      %p51 = scmp.eq.s32.totalorder %s18, 0
      %p52 = por %p50, %p51
      %p53 = scmp.ne.s32.totalorder %s42, %s45
      %p54 = scmp.eq.s32.totalorder %s23, 1
      %p55 = por %p53, %p54
      %p56 = scmp.ne.s32.totalorder %s45, %s46
      %p57 = scmp.eq.s32.totalorder %s23, 0
      %p58 = por %p56, %p57
      %p59 = scmp.ne.s32.totalorder %s45, %s46
      %p60 = scmp.eq.s32.totalorder %s24, 1
      %p61 = por %p59, %p60
      %p63 = scmp.ne.s32.totalorder %s46, %s62
      %p64 = scmp.eq.s32.totalorder %s24, 0
      %p65 = por %p63, %p64
      %s66 = ssub.s32 %s25, %s37
      %p67 = scmp.eq.s32.totalorder %s66, 0
      %s69 = sadd.s32 %s68, 1
      %s70 = scalar_select %p67, %s68, %s69
      %p73 = pneg %p67
      %p74 = scmp.eq.s32.totalorder %s18, 1
      %p75 = por %p73, %p74
      %p76 = scmp.ne.s32.totalorder %s68, %s71
      %p77 = scmp.eq.s32.totalorder %s18, 0
      %p78 = por %p76, %p77
      %p79 = scmp.ne.s32.totalorder %s68, %s71
      %p80 = scmp.eq.s32.totalorder %s23, 1
      %p81 = por %p79, %p80
      %p82 = scmp.ne.s32.totalorder %s71, %s72
      %p83 = scmp.eq.s32.totalorder %s23, 0
      %p84 = por %p82, %p83
      %p85 = scmp.ne.s32.totalorder %s71, %s72
      %p86 = scmp.eq.s32.totalorder %s24, 1
      %p87 = por %p85, %p86
      %p89 = scmp.ne.s32.totalorder %s72, %s88
      %p90 = scmp.eq.s32.totalorder %s24, 0
      %p91 = por %p89, %p90
      %s92 = ssub.s32 %s25, %s37
      %p93 = scmp.eq.s32.totalorder %s92, 0
      %s95 = sadd.s32 %s94, 1
      %s96 = scalar_select %p93, %s94, %s95
      %p99 = pneg %p93
      %p100 = scmp.eq.s32.totalorder %s18, 1
      %p101 = por %p99, %p100
      %p102 = scmp.ne.s32.totalorder %s94, %s97
      %p103 = scmp.eq.s32.totalorder %s18, 0
      %p104 = por %p102, %p103
      %p105 = scmp.ne.s32.totalorder %s94, %s97
      %p106 = scmp.eq.s32.totalorder %s23, 1
      %p107 = por %p105, %p106
      %p108 = scmp.ne.s32.totalorder %s97, %s98
      %p109 = scmp.eq.s32.totalorder %s23, 0
      %p110 = por %p108, %p109
      %p111 = scmp.ne.s32.totalorder %s97, %s98
      %p112 = scmp.eq.s32.totalorder %s24, 1
      %p113 = por %p111, %p112
      %p115 = scmp.ne.s32.totalorder %s98, %s114
      %p116 = scmp.eq.s32.totalorder %s24, 0
      %p117 = por %p115, %p116
      %s118 = ssub.s32 %s25, %s37
      %p119 = scmp.eq.s32.totalorder %s118, 0
      %s121 = sadd.s32 %s120, 1
      %s122 = scalar_select %p119, %s120, %s121
      %p125 = pneg %p119
      %p126 = scmp.eq.s32.totalorder %s18, 1
      %p127 = por %p125, %p126
      %p128 = scmp.ne.s32.totalorder %s120, %s123
      %p129 = scmp.eq.s32.totalorder %s18, 0
      %p130 = por %p128, %p129
      %p131 = scmp.ne.s32.totalorder %s120, %s123
      %p132 = scmp.eq.s32.totalorder %s23, 1
      %p133 = por %p131, %p132
      %p134 = scmp.ne.s32.totalorder %s123, %s124
      %p135 = scmp.eq.s32.totalorder %s23, 0
      %p136 = por %p134, %p135
      %p137 = scmp.ne.s32.totalorder %s123, %s124
      %p138 = scmp.eq.s32.totalorder %s24, 1
      %p139 = por %p137, %p138
      %p141 = scmp.ne.s32.totalorder %s124, %s140
      %p142 = scmp.eq.s32.totalorder %s24, 0
      %p143 = por %p141, %p142
      %s144 = ssub.s32 %s25, %s37
      %p145 = scmp.eq.s32.totalorder %s144, 0
      %s147 = sadd.s32 %s146, 1
      %s148 = scalar_select %p145, %s146, %s147
      %p151 = pneg %p145
      %p152 = scmp.eq.s32.totalorder %s18, 1
      %p153 = por %p151, %p152
      %p154 = scmp.ne.s32.totalorder %s146, %s149
      %p155 = scmp.eq.s32.totalorder %s18, 0
      %p156 = por %p154, %p155
      %p157 = scmp.ne.s32.totalorder %s146, %s149
      %p158 = scmp.eq.s32.totalorder %s23, 1
      %p159 = por %p157, %p158
      %p160 = scmp.ne.s32.totalorder %s149, %s150
      %p161 = scmp.eq.s32.totalorder %s23, 0
      %p162 = por %p160, %p161
      %p163 = scmp.ne.s32.totalorder %s149, %s150
      %p164 = scmp.eq.s32.totalorder %s24, 1
      %p165 = por %p163, %p164
      %p167 = scmp.ne.s32.totalorder %s150, %s166
      %p168 = scmp.eq.s32.totalorder %s24, 0
      %p169 = por %p167, %p168
      %s170 = ssub.s32 %s25, %s37
      %p171 = scmp.eq.s32.totalorder %s170, 0
      %s173 = sadd.s32 %s172, 1
      %s174 = scalar_select %p171, %s172, %s173
      %p177 = pneg %p171
      %p178 = scmp.eq.s32.totalorder %s18, 1
      %p179 = por %p177, %p178
      %p180 = scmp.ne.s32.totalorder %s172, %s175
      %p181 = scmp.eq.s32.totalorder %s18, 0
      %p182 = por %p180, %p181
      %p183 = scmp.ne.s32.totalorder %s172, %s175
      %p184 = scmp.eq.s32.totalorder %s23, 1
      %p185 = por %p183, %p184
      %p186 = scmp.ne.s32.totalorder %s175, %s176
      %p187 = scmp.eq.s32.totalorder %s23, 0
      %p188 = por %p186, %p187
      %p189 = scmp.ne.s32.totalorder %s175, %s176
      %p190 = scmp.eq.s32.totalorder %s24, 1
      %p191 = por %p189, %p190
      %p193 = scmp.ne.s32.totalorder %s176, %s192
      %p194 = scmp.eq.s32.totalorder %s24, 0
      %p195 = por %p193, %p194
      %s196 = ssub.s32 %s25, %s37
      %p197 = scmp.eq.s32.totalorder %s196, 0
      %s199 = sadd.s32 %s198, 1
      %s200 = scalar_select %p197, %s198, %s199
      %p203 = pneg %p197
      %p204 = scmp.eq.s32.totalorder %s18, 1
      %p205 = por %p203, %p204
      %p206 = scmp.ne.s32.totalorder %s198, %s201
      %p207 = scmp.eq.s32.totalorder %s18, 0
      %p208 = por %p206, %p207
      %p209 = scmp.ne.s32.totalorder %s198, %s201
      %p210 = scmp.eq.s32.totalorder %s23, 1
      %p211 = por %p209, %p210
      %p212 = scmp.ne.s32.totalorder %s201, %s202
      %p213 = scmp.eq.s32.totalorder %s23, 0
      %p214 = por %p212, %p213
      %p215 = scmp.ne.s32.totalorder %s201, %s202
      %p216 = scmp.eq.s32.totalorder %s24, 1
      %p217 = por %p215, %p216
      %p219 = scmp.ne.s32.totalorder %s202, %s218
      %p220 = scmp.eq.s32.totalorder %s24, 0
      %p221 = por %p219, %p220
      %s222 = ssub.s32 %s25, %s37
      %s223 = ssub.s32 %s26, %s33
      %s224 = sor.u32 %s222, %s223
      %p225 = scmp.eq.s32.totalorder %s224, 0
      %s227 = sadd.s32 %s226, 1
      %s228 = scalar_select %p225, %s226, %s227
      %p231 = pneg %p225
      %p232 = scmp.eq.s32.totalorder %s18, 1
      %p233 = por %p231, %p232
      %p234 = scmp.ne.s32.totalorder %s226, %s229
      %p235 = scmp.eq.s32.totalorder %s18, 0
      %p236 = por %p234, %p235
      %p237 = scmp.ne.s32.totalorder %s226, %s229
      %p238 = scmp.eq.s32.totalorder %s23, 1
      %p239 = por %p237, %p238
      %p240 = scmp.ne.s32.totalorder %s229, %s230
      %p241 = scmp.eq.s32.totalorder %s23, 0
      %p242 = por %p240, %p241
      %p243 = scmp.ne.s32.totalorder %s229, %s230
      %p244 = scmp.eq.s32.totalorder %s24, 1
      %p245 = por %p243, %p244
      %p247 = scmp.ne.s32.totalorder %s230, %s246
      %p248 = scmp.eq.s32.totalorder %s24, 0
      %p249 = por %p247, %p248
      %p250 = scmp.le.s32.totalorder 1, %s18
      %p251 = scmp.lt.s32.totalorder %s18, 3
      %p252 = pnand %p250, %p251
      %p253 = pneg %p252
      // Predicated region
      $region9: #{tpu_custom_call.1} parent=5 // pred_check
        _
      $region10: #{tpu_custom_call.1} parent=5 // pred_check_branch
        %255 = sbr.rel (%p252) target = $region12
      $region11: #{tpu_custom_call.1} parent=5 // pred_region
        %s256 = ssub.s32 %s18, 1
        // Predicated region
        $region13: #{tpu_custom_call.1} parent=11 // pred_check
          %p257 = pneg %p84
        $region14: #{tpu_custom_call.1} parent=11 // pred_check_branch
          %259 = sbr.rel (%p257) target = $region16
        $region15: #{tpu_custom_call.1} parent=11 // pred_region
          %p260 = scmp.lt.s32.totalorder %s27, 1
          %s261 = scalar_select %p260, %s27, 1
          %s262 = smul.addr %s261, 2
          %s263 = smul.addr %s262, 4
          %s264 = scalar_lea.vmem %s1, %s263
        $region16: #{tpu_custom_call.1} parent=11 // pred_fallthru
          _
        // Predicated region
        $region17: #{tpu_custom_call.1} parent=11 // pred_check
          %p265 = pneg %p110
        $region18: #{tpu_custom_call.1} parent=11 // pred_check_branch
          %267 = sbr.rel (%p265) target = $region20
        $region19: #{tpu_custom_call.1} parent=11 // pred_region
          %p268 = scmp.lt.s32.totalorder %s27, 1
          %s269 = scalar_select %p268, %s27, 1
          %s270 = scalar_lea.vmem %s2, %s269
        $region20: #{tpu_custom_call.1} parent=11 // pred_fallthru
          _
        // Predicated region
        $region21: #{tpu_custom_call.1} parent=11 // pred_check
          %p271 = pneg %p136
        $region22: #{tpu_custom_call.1} parent=11 // pred_check_branch
          %273 = sbr.rel (%p271) target = $region24
        $region23: #{tpu_custom_call.1} parent=11 // pred_region
          %s275 = ssub.s32 1024, 1024
          %276 = vsyncadd [#allocation3], %s275
          %s277 = smul.addr %s27, 16
          %s278 = smul.addr %s277, 64
          %s279 = scalar_lea.hbm %s3, %s278
          %s280 = sshll.u32 [#allocation2], 4
          %s281 = int_to_ptr.vmem [resolvable:$true] %s280
          %286 = dma.hbm_to_vmem [thread:$0]  %s279, 1024, %s281, [#allocation3], 64, 64, 4
        $region24: #{tpu_custom_call.1} parent=11 // pred_fallthru
          _
        // Predicated region
        $region25: #{tpu_custom_call.1} parent=11 // pred_check
          %p287 = pneg %p162
        $region26: #{tpu_custom_call.1} parent=11 // pred_check_branch
          %289 = sbr.rel (%p287) target = $region28
        $region27: #{tpu_custom_call.1} parent=11 // pred_region
          %p290 = scmp.lt.s32.totalorder %s27, 1
          %s291 = scalar_select %p290, %s27, 1
          %s292 = scalar_lea.vmem %s4, %s291
        $region28: #{tpu_custom_call.1} parent=11 // pred_fallthru
          _
        // Predicated region
        $region29: #{tpu_custom_call.1} parent=11 // pred_check
          %p293 = pneg %p188
        $region30: #{tpu_custom_call.1} parent=11 // pred_check_branch
          %295 = sbr.rel (%p293) target = $region32
        $region31: #{tpu_custom_call.1} parent=11 // pred_region
          %s297 = ssub.s32 1024, 1024
          %298 = vsyncadd [#allocation6], %s297
          %s299 = smul.addr %s27, 16
          %s300 = smul.addr %s299, 64
          %s301 = scalar_lea.hbm %s5, %s300
          %s302 = sshll.u32 [#allocation5], 4
          %s303 = int_to_ptr.vmem [resolvable:$true] %s302
          %308 = dma.hbm_to_vmem [thread:$0]  %s301, 1024, %s303, [#allocation6], 64, 64, 4
        $region32: #{tpu_custom_call.1} parent=11 // pred_fallthru
          _
        // Predicated region
        $region33: #{tpu_custom_call.1} parent=11 // pred_check
          %p309 = pneg %p214
        $region34: #{tpu_custom_call.1} parent=11 // pred_check_branch
          %311 = sbr.rel (%p309) target = $region36
        $region35: #{tpu_custom_call.1} parent=11 // pred_region
          %p312 = scmp.lt.s32.totalorder %s27, 1
          %s313 = scalar_select %p312, %s27, 1
          %s314 = scalar_lea.vmem %s6, %s313
        $region36: #{tpu_custom_call.1} parent=11 // pred_fallthru
          _
      $region12: #{tpu_custom_call.1} parent=5 // pred_fallthru
        _
      %p315 = scmp.lt.s32.totalorder %s18, 2
      // Predicated region
      $region37: #{tpu_custom_call.1} parent=5 // pred_check
        %p316 = pneg %p315
      $region38: #{tpu_custom_call.1} parent=5 // pred_check_branch
        %318 = sbr.rel (%p316) target = $region40
      $region39: #{tpu_custom_call.1} parent=5 // pred_region
        // Predicated region
        $region41: #{tpu_custom_call.1} parent=39 // pred_check
          %p319 = pneg %p52
        $region42: #{tpu_custom_call.1} parent=39 // pred_check_branch
          %321 = sbr.rel (%p319) target = $region44
        $region43: #{tpu_custom_call.1} parent=39 // pred_region
          %s322 = smul.u32 4, %s26
          %p323 = scmp.lt.s32.totalorder %s25, 1
          %s324 = scalar_select %p323, %s25, 1
          %p325 = scmp.lt.s32.totalorder %s322, 3
          %s326 = scalar_select %p325, %s322, 3
          %s327 = smul.addr %s324, 4
          %s328 = sadd.s32 %s326, %s327
          %s329 = smul.addr %s328, 8
          %s330 = scalar_lea.vmem %s0, %s329
          %s331 = smul.u32 4, %s26
        $region44: #{tpu_custom_call.1} parent=39 // pred_fallthru
          _
      $region40: #{tpu_custom_call.1} parent=5 // pred_fallthru
        _
      %p332 = scmp.le.s32.totalorder 1, %s18
      %p333 = scmp.lt.s32.totalorder %s18, 3
      %p334 = pnand %p332, %p333
      %p335 = pneg %p334
      // Predicated region
      $region45: #{tpu_custom_call.1} parent=5 // pred_check
        _
      $region46: #{tpu_custom_call.1} parent=5 // pred_check_branch
        %337 = sbr.rel (%p334) target = $region48
      $region47: #{tpu_custom_call.1} parent=5 // pred_region
        %s338 = ssub.s32 %s18, 1
        // Predicated region
        $region49: #{tpu_custom_call.1} parent=47 // pred_check
          %p339 = pneg %p136
        $region50: #{tpu_custom_call.1} parent=47 // pred_check_branch
          %341 = sbr.rel (%p339) target = $region52
        $region51: #{tpu_custom_call.1} parent=47 // pred_region
          %342 = dma.done [#allocation3], 1024
        $region52: #{tpu_custom_call.1} parent=47 // pred_fallthru
          _
        // Predicated region
        $region53: #{tpu_custom_call.1} parent=47 // pred_check
          %p343 = pneg %p188
        $region54: #{tpu_custom_call.1} parent=47 // pred_check_branch
          %345 = sbr.rel (%p343) target = $region56
        $region55: #{tpu_custom_call.1} parent=47 // pred_region
          %346 = dma.done [#allocation6], 1024
        $region56: #{tpu_custom_call.1} parent=47 // pred_fallthru
          _
        %s347 = smul.u32 4, %s28
        %p348 = scmp.lt.s32.totalorder %s27, 1
        %s349 = scalar_select %p348, %s27, 1
        %p350 = scmp.lt.s32.totalorder %s347, 3
        %s351 = scalar_select %p350, %s347, 3
        %s352 = smul.addr %s349, 4
        %s353 = sadd.s32 %s351, %s352
        %s354 = smul.addr %s353, 8
        %s355 = scalar_lea.vmem %s0, %s354
        %p356 = pneg %p58
        %p357 = pneg %p55
        %p358 = scmp.lt.s32.totalorder %s27, 1
        %s359 = scalar_select %p358, %s27, 1
        %s360 = smul.addr %s359, 2
        %s361 = smul.addr %s360, 4
        %s362 = scalar_lea.vmem %s1, %s361
        %p363 = pneg %p84
        %p364 = pneg %p81
        %p365 = scmp.lt.s32.totalorder %s27, 1
        %s366 = scalar_select %p365, %s27, 1
        %s367 = scalar_lea.vmem %s2, %s366
        %p368 = pneg %p110
        %p369 = pneg %p107
        %p370 = pneg %p136
        %p371 = pneg %p133
        %p372 = scmp.lt.s32.totalorder %s27, 1
        %s373 = scalar_select %p372, %s27, 1
        %s374 = scalar_lea.vmem %s4, %s373
        %p375 = pneg %p162
        %p376 = pneg %p159
        %p377 = pneg %p188
        %p378 = pneg %p185
        %p379 = scmp.lt.s32.totalorder %s27, 1
        %s380 = scalar_select %p379, %s27, 1
        %s381 = scalar_lea.vmem %s6, %s380
        %p382 = pneg %p214
        %p383 = pneg %p211
        %p384 = pneg %p242
        %p385 = pneg %p239
        %s386 = sand.u32 %s229, 1
        %s387 = scalar_lea.sflag [#allocation4], %s386
        %s388 = sand.u32 %s229, 1
        %s389 = smul.addr %s388, 32
        %s390 = scalar_lea.vmem [#allocation7], %s389
        %s391 = smul.u32 4, %s28
        %p392 = scmp.lt.s32.totalorder %s27, 1
        %s393 = scalar_select %p392, %s27, 1
        %p394 = scmp.lt.s32.totalorder %s391, 3
        %s395 = scalar_select %p394, %s391, 3
        %s396 = smul.addr %s393, 4
        %s397 = sadd.s32 %s395, %s396
        %s398 = smul.addr %s397, 8
        %s399 = scalar_lea.vmem %s0, %s398
        %s400 = smul.u32 4, %s28
        %p401 = scmp.lt.s32.totalorder %s27, 1
        %s402 = scalar_select %p401, %s27, 1
        %s403 = smul.addr %s402, 2
        %s404 = smul.addr %s403, 4
        %s405 = scalar_lea.vmem %s1, %s404
        %p406 = scmp.lt.s32.totalorder %s27, 1
        %s407 = scalar_select %p406, %s27, 1
        %s408 = scalar_lea.vmem %s2, %s407
        %p409 = scmp.lt.s32.totalorder %s27, 1
        %s410 = scalar_select %p409, %s27, 1
        %s411 = scalar_lea.vmem %s4, %s410
        %p412 = scmp.lt.s32.totalorder %s27, 1
        %s413 = scalar_select %p412, %s27, 1
        %s414 = scalar_lea.vmem %s6, %s413
        %s415 = smul.u32 4, %s28
        %v417 = vld [vmem:[%s399] sm:$0xff]
        %v418 = vld [vmem:[%s399 + $0x8] sm:$0xff]
        %v419 = vld [vmem:[%s399 + $0x10] sm:$0xff]
        %v420 = vld [vmem:[%s399 + $0x18] sm:$0xff]
        %v421 = vpack.c.bf16 %v418, %v417
        %v422 = vpack.c.bf16 %v420, %v419
        %v423 = vld [vmem:[%s405] sm:$0xf]
        %v424 = vld [vmem:[%s405 + $0x4] sm:$0xf]
        %v425 = vld [vmem:[%s408] sm:$0x1]
        %v427 = vlaneseq
        %v428 = vshrl.u32 %v427, 7
        %v429 = vsub.s32 0, %v428
        %v430 = vrot.slane %v425, %v429
        %v434 = vunpack.c.l.b16 %v423
        %v435 = vunpack.c.l.b16 %v424
        %v436 = vpack.c.b16 %v435, %v434
        %vm438 = vcmask 130048
        %v440 = vsel %vm438, %v421, 0
        %v443 = vsel %vm438, %v422, 0
        %445 = vmatprep.subr.bf16.mxu0 0
        %446 = vmatpush1.bf16.msra.mxu0 0
        %447 = vmatprep.subr.bf16.mxu0 0
        %448 = vmatpush1.bf16.msra.mxu0 0
        %449 = vmatprep.subr.bf16.mxu0 0
        %450 = vmatpush1.bf16.msra.mxu0 0
        %451 = vmatprep.subr.bf16.mxu0 0
        %452 = vmatpush1.bf16.msra.mxu0 0
        %453 = vmatprep.subr.bf16.mxu0 0
        %454 = vmatpush1.bf16.msra.mxu0 0
        %455 = vmatprep.subr.bf16.mxu0 0
        %456 = vmatpush1.bf16.msra.mxu0 0
        %457 = vmatprep.subr.bf16.mxu0 0
        %458 = vmatpush1.bf16.msra.mxu0 0
        %459 = vmatprep.subr.bf16.mxu0 0
        %460 = vmatpush1.bf16.msra.mxu0 %v436
        %461 = vmatprep.subr.bf16.mxu0 0
        %462 = vmatpush2.bf16.msra.mxu0 0
        %463 = vmatprep.subr.bf16.mxu0 0
        %464 = vmatpush2.bf16.msra.mxu0 0
        %465 = vmatprep.subr.bf16.mxu0 0
        %466 = vmatpush2.bf16.msra.mxu0 0
        %467 = vmatprep.subr.bf16.mxu0 0
        %468 = vmatpush2.bf16.msra.mxu0 0
        %469 = vmatprep.subr.bf16.mxu0 0
        %470 = vmatpush2.bf16.msra.mxu0 0
        %471 = vmatprep.subr.bf16.mxu0 0
        %472 = vmatpush2.bf16.msra.mxu0 0
        %473 = vmatprep.subr.bf16.mxu0 0
        %474 = vmatpush2.bf16.msra.mxu0 0
        %475 = vmatprep.subr.bf16.mxu0 0
        %476 = vmatpush2.bf16.msra.mxu0 0
        %477 = vmatprep.mubr.bf16.mxu0 0
        %478 = vmatmul.mubr.bf16.gmra.mxu0 %v440
        %v479 = vpop.f32.mrf.mxu0
        %v480 = vadd.f32 %v430, %v479
        %v481 = vpop.f32.mrf.mxu0
        %v482 = vpop.f32.mrf.mxu0
        %v483 = vadd.f32 %v430, %v482
        %v484 = vpop.f32.mrf.mxu0
        %485 = vmatprep.mubr.bf16.mxu0 0
        %486 = vmatmul.mubr.bf16.gmra.mxu0 %v443
        %v487 = vpop.f32.mrf.mxu0
        %v488 = vadd.f32 %v430, %v487
        %v489 = vpop.f32.mrf.mxu0
        %v490 = vpop.f32.mrf.mxu0
        %v491 = vadd.f32 %v430, %v490
        %v492 = vpop.f32.mrf.mxu0
        %493 = vdwg.mxu0
        %v494 = vmax.f32 %v480, 0.0
        %v495 = vmax.f32 %v483, 0.0
        %v496 = vmax.f32 %v488, 0.0
        %v497 = vmax.f32 %v491, 0.0
        %v498 = vpack.c.bf16 %v495, %v494
        %v499 = vpack.c.bf16 %v497, %v496
        %v500 = vld [vmem:[#allocation2] sm:$0xf]
        %v501 = vld [vmem:[#allocation2 + $0x4] sm:$0xf]
        %v502 = vld [vmem:[#allocation2 + $0x8] sm:$0xf]
        %v503 = vld [vmem:[#allocation2 + $0xc] sm:$0xf]
        %v504 = vld [vmem:[#allocation2 + $0x10] sm:$0xf]
        %v505 = vld [vmem:[#allocation2 + $0x14] sm:$0xf]
        %v506 = vld [vmem:[#allocation2 + $0x18] sm:$0xf]
        %v507 = vld [vmem:[#allocation2 + $0x1c] sm:$0xf]
        %v508 = vld [vmem:[#allocation2 + $0x20] sm:$0xf]
        %v509 = vld [vmem:[#allocation2 + $0x24] sm:$0xf]
        %v510 = vld [vmem:[#allocation2 + $0x28] sm:$0xf]
        %v511 = vld [vmem:[#allocation2 + $0x2c] sm:$0xf]
        %v512 = vld [vmem:[#allocation2 + $0x30] sm:$0xf]
        %v513 = vld [vmem:[#allocation2 + $0x34] sm:$0xf]
        %v514 = vld [vmem:[#allocation2 + $0x38] sm:$0xf]
        %v515 = vld [vmem:[#allocation2 + $0x3c] sm:$0xf]
        %v516 = vld [vmem:[%s411] sm:$0x1]
        %v518 = vlaneseq
        %v519 = vshrl.u32 %v518, 7
        %v520 = vsub.s32 0, %v519
        %v521 = vrot.slane %v516, %v520
        %v539 = vunpack.c.l.b16 %v500
        %v540 = vunpack.c.l.b16 %v501
        %v541 = vunpack.c.l.b16 %v502
        %v542 = vunpack.c.l.b16 %v503
        %v543 = vunpack.c.l.b16 %v504
        %v544 = vunpack.c.l.b16 %v505
        %v545 = vunpack.c.l.b16 %v506
        %v546 = vunpack.c.l.b16 %v507
        %v547 = vunpack.c.l.b16 %v508
        %v548 = vunpack.c.l.b16 %v509
        %v549 = vunpack.c.l.b16 %v510
        %v550 = vunpack.c.l.b16 %v511
        %v551 = vunpack.c.l.b16 %v512
        %v552 = vunpack.c.l.b16 %v513
        %v553 = vunpack.c.l.b16 %v514
        %v554 = vunpack.c.l.b16 %v515
        %v555 = vpack.c.b16 %v540, %v539
        %v556 = vpack.c.b16 %v542, %v541
        %v557 = vpack.c.b16 %v544, %v543
        %v558 = vpack.c.b16 %v546, %v545
        %v559 = vpack.c.b16 %v548, %v547
        %v560 = vpack.c.b16 %v550, %v549
        %v561 = vpack.c.b16 %v552, %v551
        %v562 = vpack.c.b16 %v554, %v553
        %571 = vmatprep.subr.bf16.mxu0 0
        %572 = vmatpush1.bf16.msra.mxu0 %v562
        %573 = vmatprep.subr.bf16.mxu0 0
        %574 = vmatpush1.bf16.msra.mxu0 %v561
        %575 = vmatprep.subr.bf16.mxu0 0
        %576 = vmatpush1.bf16.msra.mxu0 %v560
        %577 = vmatprep.subr.bf16.mxu0 0
        %578 = vmatpush1.bf16.msra.mxu0 %v559
        %579 = vmatprep.subr.bf16.mxu0 0
        %580 = vmatpush1.bf16.msra.mxu0 %v558
        %581 = vmatprep.subr.bf16.mxu0 0
        %582 = vmatpush1.bf16.msra.mxu0 %v557
        %583 = vmatprep.subr.bf16.mxu0 0
        %584 = vmatpush1.bf16.msra.mxu0 %v556
        %585 = vmatprep.subr.bf16.mxu0 0
        %586 = vmatpush1.bf16.msra.mxu0 %v555
        %587 = vmatprep.subr.bf16.mxu0 0
        %588 = vmatpush2.bf16.msra.mxu0 0
        %589 = vmatprep.subr.bf16.mxu0 0
        %590 = vmatpush2.bf16.msra.mxu0 0
        %591 = vmatprep.subr.bf16.mxu0 0
        %592 = vmatpush2.bf16.msra.mxu0 0
        %593 = vmatprep.subr.bf16.mxu0 0
        %594 = vmatpush2.bf16.msra.mxu0 0
        %595 = vmatprep.subr.bf16.mxu0 0
        %596 = vmatpush2.bf16.msra.mxu0 0
        %597 = vmatprep.subr.bf16.mxu0 0
        %598 = vmatpush2.bf16.msra.mxu0 0
        %599 = vmatprep.subr.bf16.mxu0 0
        %600 = vmatpush2.bf16.msra.mxu0 0
        %601 = vmatprep.subr.bf16.mxu0 0
        %602 = vmatpush2.bf16.msra.mxu0 0
        %603 = vmatprep.mubr.bf16.mxu0 0
        %604 = vmatmul.mubr.bf16.gmra.mxu0 %v498
        %v605 = vpop.f32.mrf.mxu0
        %v606 = vadd.f32 %v521, %v605
        %v607 = vpop.f32.mrf.mxu0
        %v608 = vpop.f32.mrf.mxu0
        %v609 = vadd.f32 %v521, %v608
        %v610 = vpop.f32.mrf.mxu0
        %611 = vmatprep.mubr.bf16.mxu0 0
        %612 = vmatmul.mubr.bf16.gmra.mxu0 %v499
        %v613 = vpop.f32.mrf.mxu0
        %v614 = vadd.f32 %v521, %v613
        %v615 = vpop.f32.mrf.mxu0
        %v616 = vpop.f32.mrf.mxu0
        %v617 = vadd.f32 %v521, %v616
        %v618 = vpop.f32.mrf.mxu0
        %619 = vdwg.mxu0
        %v620 = vmax.f32 %v606, 0.0
        %v621 = vmax.f32 %v609, 0.0
        %v622 = vmax.f32 %v614, 0.0
        %v623 = vmax.f32 %v617, 0.0
        %v624 = vpack.c.bf16 %v621, %v620
        %v625 = vpack.c.bf16 %v623, %v622
        %v626 = vld [vmem:[#allocation5] sm:$0xf]
        %v627 = vld [vmem:[#allocation5 + $0x4] sm:$0xf]
        %v628 = vld [vmem:[#allocation5 + $0x8] sm:$0xf]
        %v629 = vld [vmem:[#allocation5 + $0xc] sm:$0xf]
        %v630 = vld [vmem:[#allocation5 + $0x10] sm:$0xf]
        %v631 = vld [vmem:[#allocation5 + $0x14] sm:$0xf]
        %v632 = vld [vmem:[#allocation5 + $0x18] sm:$0xf]
        %v633 = vld [vmem:[#allocation5 + $0x1c] sm:$0xf]
        %v634 = vld [vmem:[#allocation5 + $0x20] sm:$0xf]
        %v635 = vld [vmem:[#allocation5 + $0x24] sm:$0xf]
        %v636 = vld [vmem:[#allocation5 + $0x28] sm:$0xf]
        %v637 = vld [vmem:[#allocation5 + $0x2c] sm:$0xf]
        %v638 = vld [vmem:[#allocation5 + $0x30] sm:$0xf]
        %v639 = vld [vmem:[#allocation5 + $0x34] sm:$0xf]
        %v640 = vld [vmem:[#allocation5 + $0x38] sm:$0xf]
        %v641 = vld [vmem:[#allocation5 + $0x3c] sm:$0xf]
        %v642 = vld [vmem:[%s414] sm:$0x1]
        %v644 = vlaneseq
        %v645 = vshrl.u32 %v644, 7
        %v646 = vsub.s32 0, %v645
        %v647 = vrot.slane %v642, %v646
        %v665 = vunpack.c.l.b16 %v626
        %v666 = vunpack.c.l.b16 %v627
        %v667 = vunpack.c.l.b16 %v628
        %v668 = vunpack.c.l.b16 %v629
        %v669 = vunpack.c.l.b16 %v630
        %v670 = vunpack.c.l.b16 %v631
        %v671 = vunpack.c.l.b16 %v632
        %v672 = vunpack.c.l.b16 %v633
        %v673 = vunpack.c.l.b16 %v634
        %v674 = vunpack.c.l.b16 %v635
        %v675 = vunpack.c.l.b16 %v636
        %v676 = vunpack.c.l.b16 %v637
        %v677 = vunpack.c.l.b16 %v638
        %v678 = vunpack.c.l.b16 %v639
        %v679 = vunpack.c.l.b16 %v640
        %v680 = vunpack.c.l.b16 %v641
        %v681 = vpack.c.b16 %v666, %v665
        %v682 = vpack.c.b16 %v668, %v667
        %v683 = vpack.c.b16 %v670, %v669
        %v684 = vpack.c.b16 %v672, %v671
        %v685 = vpack.c.b16 %v674, %v673
        %v686 = vpack.c.b16 %v676, %v675
        %v687 = vpack.c.b16 %v678, %v677
        %v688 = vpack.c.b16 %v680, %v679
        %697 = vmatprep.subr.bf16.mxu0 0
        %698 = vmatpush1.bf16.msra.mxu0 %v688
        %699 = vmatprep.subr.bf16.mxu0 0
        %700 = vmatpush1.bf16.msra.mxu0 %v687
        %701 = vmatprep.subr.bf16.mxu0 0
        %702 = vmatpush1.bf16.msra.mxu0 %v686
        %703 = vmatprep.subr.bf16.mxu0 0
        %704 = vmatpush1.bf16.msra.mxu0 %v685
        %705 = vmatprep.subr.bf16.mxu0 0
        %706 = vmatpush1.bf16.msra.mxu0 %v684
        %707 = vmatprep.subr.bf16.mxu0 0
        %708 = vmatpush1.bf16.msra.mxu0 %v683
        %709 = vmatprep.subr.bf16.mxu0 0
        %710 = vmatpush1.bf16.msra.mxu0 %v682
        %711 = vmatprep.subr.bf16.mxu0 0
        %712 = vmatpush1.bf16.msra.mxu0 %v681
        %713 = vmatprep.subr.bf16.mxu0 0
        %714 = vmatpush2.bf16.msra.mxu0 0
        %715 = vmatprep.subr.bf16.mxu0 0
        %716 = vmatpush2.bf16.msra.mxu0 0
        %717 = vmatprep.subr.bf16.mxu0 0
        %718 = vmatpush2.bf16.msra.mxu0 0
        %719 = vmatprep.subr.bf16.mxu0 0
        %720 = vmatpush2.bf16.msra.mxu0 0
        %721 = vmatprep.subr.bf16.mxu0 0
        %722 = vmatpush2.bf16.msra.mxu0 0
        %723 = vmatprep.subr.bf16.mxu0 0
        %724 = vmatpush2.bf16.msra.mxu0 0
        %725 = vmatprep.subr.bf16.mxu0 0
        %726 = vmatpush2.bf16.msra.mxu0 0
        %727 = vmatprep.subr.bf16.mxu0 0
        %728 = vmatpush2.bf16.msra.mxu0 0
        %729 = vmatprep.mubr.bf16.mxu0 0
        %730 = vmatmul.mubr.bf16.gmra.mxu0 %v624
        %v731 = vpop.f32.mrf.mxu0
        %v732 = vadd.f32 %v647, %v731
        %v733 = vpop.f32.mrf.mxu0
        %v734 = vpop.f32.mrf.mxu0
        %v735 = vadd.f32 %v647, %v734
        %v736 = vpop.f32.mrf.mxu0
        %737 = vmatprep.mubr.bf16.mxu0 0
        %738 = vmatmul.mubr.bf16.gmra.mxu0 %v625
        %v739 = vpop.f32.mrf.mxu0
        %v740 = vadd.f32 %v647, %v739
        %v741 = vpop.f32.mrf.mxu0
        %v742 = vpop.f32.mrf.mxu0
        %v743 = vadd.f32 %v647, %v742
        %v744 = vpop.f32.mrf.mxu0
        %745 = vdwg.mxu0
        %746 = vst [vmem:[%s390] sm:$0xff] %v732
        %747 = vst [vmem:[%s390 + $0x8] sm:$0xff] %v735
        %748 = vst [vmem:[%s390 + $0x10] sm:$0xff] %v740
        %749 = vst [vmem:[%s390 + $0x18] sm:$0xff] %v743
        %s750 = sand.u32 %s229, 1
        %s751 = scalar_lea.sflag [#allocation4], %s750
        %s752 = sand.u32 %s229, 1
        %s753 = smul.addr %s752, 32
        %s754 = scalar_lea.vmem [#allocation7], %s753
        // Predicated region
        $region57: #{tpu_custom_call.1} parent=47 // pred_check
          %p755 = pneg %p239
        $region58: #{tpu_custom_call.1} parent=47 // pred_check_branch
          %757 = sbr.rel (%p755) target = $region60
        $region59: #{tpu_custom_call.1} parent=47 // pred_region
          %s758 = smul.u32 4, %s28
          %s760 = ssub.s32 512, 512
          %761 = vsyncadd %s751, %s760
          %s762 = smul.addr %s27, 4
          %s763 = sadd.s32 %s758, %s762
          %s764 = smul.addr %s763, 128
          %s765 = scalar_lea.hbm %s7, %s764
          %s766 = sshll.u32 %s754, 4
          %s767 = int_to_ptr.vmem [resolvable:$true] %s766
          %772 = dma.vmem_to_hbm [thread:$0]  %s767, 512, %s765, %s751, 128, 128, 8
        $region60: #{tpu_custom_call.1} parent=47 // pred_fallthru
          _
      $region48: #{tpu_custom_call.1} parent=5 // pred_fallthru
        _
      %p773 = scmp.le.s32.totalorder 2, %s18
      // Predicated region
      $region61: #{tpu_custom_call.1} parent=5 // pred_check
        %p774 = pneg %p773
      $region62: #{tpu_custom_call.1} parent=5 // pred_check_branch
        %776 = sbr.rel (%p774) target = $region64
      $region63: #{tpu_custom_call.1} parent=5 // pred_region
        %s777 = ssub.s32 %s18, 2
        // Predicated region
        $region65: #{tpu_custom_call.1} parent=63 // pred_check
          %p778 = pneg %p245
        $region66: #{tpu_custom_call.1} parent=63 // pred_check_branch
          %780 = sbr.rel (%p778) target = $region68
        $region67: #{tpu_custom_call.1} parent=63 // pred_region
          %s781 = sand.u32 %s230, 1
          %s782 = scalar_lea.sflag [#allocation4], %s781
          %s783 = sand.u32 %s230, 1
          %s784 = smul.addr %s783, 32
          %s785 = scalar_lea.vmem [#allocation7], %s784
          %786 = dma.done %s782, 512
        $region68: #{tpu_custom_call.1} parent=63 // pred_fallthru
          _
      $region64: #{tpu_custom_call.1} parent=5 // pred_fallthru
        _
    $region6: #{tpu_custom_call.1} parent=1 // loop_footer
      %s22 = sadd.s32 1, %s18
    $region7: #{tpu_custom_call.1} parent=1 // loop_footer_branch
      %17 = sbr.rel target = $region3
    $region8: #{tpu_custom_call.1} parent=1 // loop_exit
      _
    %787 = vsyncpa [#allocation3], 1
    %s788 = scalar_lea.sflag [#allocation3], 1
    %789 = vsyncpa %s788, 1
    %790 = vsyncpa [#allocation6], 1
    %791 = vsyncpa [#allocation4], 1
    %s792 = scalar_lea.sflag [#allocation4], 1
    %793 = vsyncpa %s792, 1

// kernel: tpu_custom_call.1
$region0: #{tpu_custom_call.1}
  #allocation0 [shape = 'u32[]', space=smem, size = 0x4, offset = 0x4, fixed_abs, tag = 'smem constant byte address 0x4 - core index']
  #allocation1 [shape = 'u32[144,128]{1,0:T(1,128)}', space=vmem, size = 0x12000, scoped, tag = 'internal scratch']
  %s0 = inlined_call_operand.vmem [shape: f32[2,32,16], index: 0, kind: input, shape index: {}]
  %s1 = inlined_call_operand.vmem [shape: bf16[2,16,128], index: 1, kind: input, shape index: {}]
  %s2 = inlined_call_operand.vmem [shape: f32[2,1,128], index: 2, kind: input, shape index: {}]
  %s3 = inlined_call_operand.hbm [shape: bf16[2,128,128], index: 3, kind: input, shape index: {}]
  %s4 = inlined_call_operand.vmem [shape: f32[2,1,128], index: 4, kind: input, shape index: {}]
  %s5 = inlined_call_operand.hbm [shape: bf16[2,128,128], index: 5, kind: input, shape index: {}]
  %s6 = inlined_call_operand.vmem [shape: f32[2,1,128], index: 6, kind: input, shape index: {}]
  %s7 = inlined_call_operand.hbm [shape: f32[2,32,128], index: 7, kind: output, shape index: {}]
  %s8 = sld [smem:[#allocation0]]
  $region69: #{tpu_custom_call.1} parent=0
    _
  %s10 = ssub.s32 1, %s8
  %s11 = scalar_select 0, %s10, %s8
  $region1: #{tpu_custom_call.1} parent=0
    #allocation2 [shape = 'u8[65536]{0}', space=vmem, size = 0x10000, scoped, tag = 'input window, operand 3']
    #allocation3 [shape = 's32[2]{0}', space=sflag, size = 0x8, scoped, tag = 'scoped memory for tpu_custom_call.1']
    #allocation4 [shape = 's32[2]{0}', space=sflag, size = 0x8, scoped, tag = 'scoped memory for tpu_custom_call.1']
    #allocation5 [shape = 'u8[65536]{0}', space=vmem, size = 0x10000, scoped, tag = 'input window, operand 5']
    #allocation6 [shape = 's32[2]{0}', space=sflag, size = 0x8, scoped, tag = 'scoped memory for tpu_custom_call.1']
    #allocation7 [shape = 'u8[32768]{0}', space=vmem, size = 0x8000, scoped, tag = 'output window, operand 0']
    %12 = vsyncpa [#allocation3], 0
    %s13 = scalar_lea.sflag [#allocation3], 1
    %14 = vsyncpa %s13, 0
    %15 = vsyncpa [#allocation6], 0
    %s16 = scalar_lea.sflag [#allocation6], 1
    %17 = vsyncpa %s16, 0
    %18 = vsyncpa [#allocation4], 0
    %s19 = scalar_lea.sflag [#allocation4], 1
    %20 = vsyncpa %s19, 0
    loop: start=0, step=1, limit=4
    $region2: #{tpu_custom_call.1} parent=1 // loop_pre_header
      _
    $region3: #{tpu_custom_call.1} parent=1 // loop_header
      %s22 = sphi 0, %s26
      %p23 = scmp.ge.s32.totalorder %s22, 4
      %s29 = sphi 0, %s41
      %s30 = sphi 0, %s37
      %s31 = sphi 0, %s29
      %s32 = sphi 0, %s30
      %s33 = sphi 0, %s31
      %s34 = sphi 0, %s32
      %s46 = sphi 0, %s48
      %s49 = sphi 0, %s46
      %s50 = sphi 0, %s49
      %s66 = sphi 0, %s50
      %s72 = sphi 0, %s74
      %s75 = sphi 0, %s72
      %s76 = sphi 0, %s75
      %s92 = sphi 0, %s76
      %s98 = sphi 0, %s100
      %s101 = sphi 0, %s98
      %s102 = sphi 0, %s101
      %s118 = sphi 0, %s102
      %s124 = sphi 0, %s126
      %s127 = sphi 0, %s124
      %s128 = sphi 0, %s127
      %s144 = sphi 0, %s128
      %s150 = sphi 0, %s152
      %s153 = sphi 0, %s150
      %s154 = sphi 0, %s153
      %s170 = sphi 0, %s154
      %s176 = sphi 0, %s178
      %s179 = sphi 0, %s176
      %s180 = sphi 0, %s179
      %s196 = sphi 0, %s180
      %s202 = sphi 0, %s204
      %s205 = sphi 0, %s202
      %s206 = sphi 0, %s205
      %s222 = sphi 0, %s206
      %s230 = sphi 0, %s232
      %s233 = sphi 0, %s230
      %s234 = sphi 0, %s233
      %s250 = sphi 0, %s234
    $region4: #{tpu_custom_call.1} parent=1 // loop_header_branch
      %25 = sbr.rel (%p23) target = $region8
    $region5: #{tpu_custom_call.1} parent=1 // loop_body
      %s27 = ssub.s32 %s22, 1
      %s28 = ssub.s32 %s22, 2
      %s35 = sadd.s32 1, %s30
      %p36 = scmp.ge.s32.totalorder %s35, 1
      %s37 = scalar_select %p36, 0, %s35
      %s38 = sadd.s32 1, %s29
      %s39 = scalar_select %p36, %s38, %s29
      %p40 = scmp.ge.s32.totalorder %s39, 2
      %s41 = scalar_select %p40, 0, %s39
      %s42 = ssub.s32 %s29, %s41
      %s43 = ssub.s32 %s30, %s37
      %s44 = sor.u32 %s42, %s43
      %p45 = scmp.eq.s32.totalorder %s44, 0
      %s47 = sadd.s32 %s46, 1
      %s48 = scalar_select %p45, %s46, %s47
      %p51 = pneg %p45
      %p52 = scmp.eq.s32.totalorder %s22, 1
      %p53 = por %p51, %p52
      %p54 = scmp.ne.s32.totalorder %s46, %s49
      %p55 = scmp.eq.s32.totalorder %s22, 0
      %p56 = por %p54, %p55
      %p57 = scmp.ne.s32.totalorder %s46, %s49
      %p58 = scmp.eq.s32.totalorder %s27, 1
      %p59 = por %p57, %p58
      %p60 = scmp.ne.s32.totalorder %s49, %s50
      %p61 = scmp.eq.s32.totalorder %s27, 0
      %p62 = por %p60, %p61
      %p63 = scmp.ne.s32.totalorder %s49, %s50
      %p64 = scmp.eq.s32.totalorder %s28, 1
      %p65 = por %p63, %p64
      %p67 = scmp.ne.s32.totalorder %s50, %s66
      %p68 = scmp.eq.s32.totalorder %s28, 0
      %p69 = por %p67, %p68
      %s70 = ssub.s32 %s29, %s41
      %p71 = scmp.eq.s32.totalorder %s70, 0
      %s73 = sadd.s32 %s72, 1
      %s74 = scalar_select %p71, %s72, %s73
      %p77 = pneg %p71
      %p78 = scmp.eq.s32.totalorder %s22, 1
      %p79 = por %p77, %p78
      %p80 = scmp.ne.s32.totalorder %s72, %s75
      %p81 = scmp.eq.s32.totalorder %s22, 0
      %p82 = por %p80, %p81
      %p83 = scmp.ne.s32.totalorder %s72, %s75
      %p84 = scmp.eq.s32.totalorder %s27, 1
      %p85 = por %p83, %p84
      %p86 = scmp.ne.s32.totalorder %s75, %s76
      %p87 = scmp.eq.s32.totalorder %s27, 0
      %p88 = por %p86, %p87
      %p89 = scmp.ne.s32.totalorder %s75, %s76
      %p90 = scmp.eq.s32.totalorder %s28, 1
      %p91 = por %p89, %p90
      %p93 = scmp.ne.s32.totalorder %s76, %s92
      %p94 = scmp.eq.s32.totalorder %s28, 0
      %p95 = por %p93, %p94
      %s96 = ssub.s32 %s29, %s41
      %p97 = scmp.eq.s32.totalorder %s96, 0
      %s99 = sadd.s32 %s98, 1
      %s100 = scalar_select %p97, %s98, %s99
      %p103 = pneg %p97
      %p104 = scmp.eq.s32.totalorder %s22, 1
      %p105 = por %p103, %p104
      %p106 = scmp.ne.s32.totalorder %s98, %s101
      %p107 = scmp.eq.s32.totalorder %s22, 0
      %p108 = por %p106, %p107
      %p109 = scmp.ne.s32.totalorder %s98, %s101
      %p110 = scmp.eq.s32.totalorder %s27, 1
      %p111 = por %p109, %p110
      %p112 = scmp.ne.s32.totalorder %s101, %s102
      %p113 = scmp.eq.s32.totalorder %s27, 0
      %p114 = por %p112, %p113
      %p115 = scmp.ne.s32.totalorder %s101, %s102
      %p116 = scmp.eq.s32.totalorder %s28, 1
      %p117 = por %p115, %p116
      %p119 = scmp.ne.s32.totalorder %s102, %s118
      %p120 = scmp.eq.s32.totalorder %s28, 0
      %p121 = por %p119, %p120
      %s122 = ssub.s32 %s29, %s41
      %p123 = scmp.eq.s32.totalorder %s122, 0
      %s125 = sadd.s32 %s124, 1
      %s126 = scalar_select %p123, %s124, %s125
      %p129 = pneg %p123
      %p130 = scmp.eq.s32.totalorder %s22, 1
      %p131 = por %p129, %p130
      %p132 = scmp.ne.s32.totalorder %s124, %s127
      %p133 = scmp.eq.s32.totalorder %s22, 0
      %p134 = por %p132, %p133
      %p135 = scmp.ne.s32.totalorder %s124, %s127
      %p136 = scmp.eq.s32.totalorder %s27, 1
      %p137 = por %p135, %p136
      %p138 = scmp.ne.s32.totalorder %s127, %s128
      %p139 = scmp.eq.s32.totalorder %s27, 0
      %p140 = por %p138, %p139
      %p141 = scmp.ne.s32.totalorder %s127, %s128
      %p142 = scmp.eq.s32.totalorder %s28, 1
      %p143 = por %p141, %p142
      %p145 = scmp.ne.s32.totalorder %s128, %s144
      %p146 = scmp.eq.s32.totalorder %s28, 0
      %p147 = por %p145, %p146
      %s148 = ssub.s32 %s29, %s41
      %p149 = scmp.eq.s32.totalorder %s148, 0
      %s151 = sadd.s32 %s150, 1
      %s152 = scalar_select %p149, %s150, %s151
      %p155 = pneg %p149
      %p156 = scmp.eq.s32.totalorder %s22, 1
      %p157 = por %p155, %p156
      %p158 = scmp.ne.s32.totalorder %s150, %s153
      %p159 = scmp.eq.s32.totalorder %s22, 0
      %p160 = por %p158, %p159
      %p161 = scmp.ne.s32.totalorder %s150, %s153
      %p162 = scmp.eq.s32.totalorder %s27, 1
      %p163 = por %p161, %p162
      %p164 = scmp.ne.s32.totalorder %s153, %s154
      %p165 = scmp.eq.s32.totalorder %s27, 0
      %p166 = por %p164, %p165
      %p167 = scmp.ne.s32.totalorder %s153, %s154
      %p168 = scmp.eq.s32.totalorder %s28, 1
      %p169 = por %p167, %p168
      %p171 = scmp.ne.s32.totalorder %s154, %s170
      %p172 = scmp.eq.s32.totalorder %s28, 0
      %p173 = por %p171, %p172
      %s174 = ssub.s32 %s29, %s41
      %p175 = scmp.eq.s32.totalorder %s174, 0
      %s177 = sadd.s32 %s176, 1
      %s178 = scalar_select %p175, %s176, %s177
      %p181 = pneg %p175
      %p182 = scmp.eq.s32.totalorder %s22, 1
      %p183 = por %p181, %p182
      %p184 = scmp.ne.s32.totalorder %s176, %s179
      %p185 = scmp.eq.s32.totalorder %s22, 0
      %p186 = por %p184, %p185
      %p187 = scmp.ne.s32.totalorder %s176, %s179
      %p188 = scmp.eq.s32.totalorder %s27, 1
      %p189 = por %p187, %p188
      %p190 = scmp.ne.s32.totalorder %s179, %s180
      %p191 = scmp.eq.s32.totalorder %s27, 0
      %p192 = por %p190, %p191
      %p193 = scmp.ne.s32.totalorder %s179, %s180
      %p194 = scmp.eq.s32.totalorder %s28, 1
      %p195 = por %p193, %p194
      %p197 = scmp.ne.s32.totalorder %s180, %s196
      %p198 = scmp.eq.s32.totalorder %s28, 0
      %p199 = por %p197, %p198
      %s200 = ssub.s32 %s29, %s41
      %p201 = scmp.eq.s32.totalorder %s200, 0
      %s203 = sadd.s32 %s202, 1
      %s204 = scalar_select %p201, %s202, %s203
      %p207 = pneg %p201
      %p208 = scmp.eq.s32.totalorder %s22, 1
      %p209 = por %p207, %p208
      %p210 = scmp.ne.s32.totalorder %s202, %s205
      %p211 = scmp.eq.s32.totalorder %s22, 0
      %p212 = por %p210, %p211
      %p213 = scmp.ne.s32.totalorder %s202, %s205
      %p214 = scmp.eq.s32.totalorder %s27, 1
      %p215 = por %p213, %p214
      %p216 = scmp.ne.s32.totalorder %s205, %s206
      %p217 = scmp.eq.s32.totalorder %s27, 0
      %p218 = por %p216, %p217
      %p219 = scmp.ne.s32.totalorder %s205, %s206
      %p220 = scmp.eq.s32.totalorder %s28, 1
      %p221 = por %p219, %p220
      %p223 = scmp.ne.s32.totalorder %s206, %s222
      %p224 = scmp.eq.s32.totalorder %s28, 0
      %p225 = por %p223, %p224
      %s226 = ssub.s32 %s29, %s41
      %s227 = ssub.s32 %s30, %s37
      %s228 = sor.u32 %s226, %s227
      %p229 = scmp.eq.s32.totalorder %s228, 0
      %s231 = sadd.s32 %s230, 1
      %s232 = scalar_select %p229, %s230, %s231
      %p235 = pneg %p229
      %p236 = scmp.eq.s32.totalorder %s22, 1
      %p237 = por %p235, %p236
      %p238 = scmp.ne.s32.totalorder %s230, %s233
      %p239 = scmp.eq.s32.totalorder %s22, 0
      %p240 = por %p238, %p239
      %p241 = scmp.ne.s32.totalorder %s230, %s233
      %p242 = scmp.eq.s32.totalorder %s27, 1
      %p243 = por %p241, %p242
      %p244 = scmp.ne.s32.totalorder %s233, %s234
      %p245 = scmp.eq.s32.totalorder %s27, 0
      %p246 = por %p244, %p245
      %p247 = scmp.ne.s32.totalorder %s233, %s234
      %p248 = scmp.eq.s32.totalorder %s28, 1
      %p249 = por %p247, %p248
      %p251 = scmp.ne.s32.totalorder %s234, %s250
      %p252 = scmp.eq.s32.totalorder %s28, 0
      %p253 = por %p251, %p252
      %p254 = scmp.le.s32.totalorder 1, %s22
      %p255 = scmp.lt.s32.totalorder %s22, 3
      %p256 = pnand %p254, %p255
      %p257 = pneg %p256
      // Predicated region
      $region9: #{tpu_custom_call.1} parent=5 // pred_check
        _
      $region10: #{tpu_custom_call.1} parent=5 // pred_check_branch
        %259 = sbr.rel (%p256) target = $region12
      $region11: #{tpu_custom_call.1} parent=5 // pred_region
        %s260 = ssub.s32 %s22, 1
      $region12: #{tpu_custom_call.1} parent=5 // pred_fallthru
        _
      %p261 = scmp.lt.s32.totalorder %s22, 2
      // Predicated region
      $region13: #{tpu_custom_call.1} parent=5 // pred_check
        %p262 = pneg %p261
      $region14: #{tpu_custom_call.1} parent=5 // pred_check_branch
        %264 = sbr.rel (%p262) target = $region16
      $region15: #{tpu_custom_call.1} parent=5 // pred_region
        // Predicated region
        $region17: #{tpu_custom_call.1} parent=15 // pred_check
          %p265 = pneg %p56
        $region18: #{tpu_custom_call.1} parent=15 // pred_check_branch
          %267 = sbr.rel (%p265) target = $region20
        $region19: #{tpu_custom_call.1} parent=15 // pred_region
          %s268 = smul.u32 4, %s30
          %p269 = scmp.lt.s32.totalorder %s29, 1
          %s270 = scalar_select %p269, %s29, 1
          %p271 = scmp.lt.s32.totalorder %s268, 3
          %s272 = scalar_select %p271, %s268, 3
          %s273 = smul.addr %s270, 4
          %s274 = sadd.s32 %s272, %s273
          %s275 = smul.addr %s274, 8
          %s276 = scalar_lea.vmem %s0, %s275
          %s277 = smul.u32 4, %s30
        $region20: #{tpu_custom_call.1} parent=15 // pred_fallthru
          _
        // Predicated region
        $region21: #{tpu_custom_call.1} parent=15 // pred_check
          %p278 = pneg %p82
        $region22: #{tpu_custom_call.1} parent=15 // pred_check_branch
          %280 = sbr.rel (%p278) target = $region24
        $region23: #{tpu_custom_call.1} parent=15 // pred_region
          %p281 = scmp.lt.s32.totalorder %s29, 1
          %s282 = scalar_select %p281, %s29, 1
          %s283 = smul.addr %s282, 2
          %s284 = smul.addr %s283, 4
          %s285 = scalar_lea.vmem %s1, %s284
        $region24: #{tpu_custom_call.1} parent=15 // pred_fallthru
          _
        // Predicated region
        $region25: #{tpu_custom_call.1} parent=15 // pred_check
          %p286 = pneg %p108
        $region26: #{tpu_custom_call.1} parent=15 // pred_check_branch
          %288 = sbr.rel (%p286) target = $region28
        $region27: #{tpu_custom_call.1} parent=15 // pred_region
          %p289 = scmp.lt.s32.totalorder %s29, 1
          %s290 = scalar_select %p289, %s29, 1
          %s291 = scalar_lea.vmem %s2, %s290
        $region28: #{tpu_custom_call.1} parent=15 // pred_fallthru
          _
        // Predicated region
        $region29: #{tpu_custom_call.1} parent=15 // pred_check
          %p292 = pneg %p134
        $region30: #{tpu_custom_call.1} parent=15 // pred_check_branch
          %294 = sbr.rel (%p292) target = $region32
        $region31: #{tpu_custom_call.1} parent=15 // pred_region
          %s295 = sand.u32 %s124, 1
          %s296 = scalar_lea.sflag [#allocation3], %s295
          %s297 = sand.u32 %s124, 1
          %s298 = smul.addr %s297, 64
          %s299 = scalar_lea.vmem [#allocation2], %s298
          %s301 = ssub.s32 1024, 1024
          %302 = vsyncadd %s296, %s301
          %s303 = smul.addr %s29, 16
          %s304 = smul.addr %s303, 64
          %s305 = scalar_lea.hbm %s3, %s304
          %s306 = sshll.u32 %s299, 4
          %s307 = int_to_ptr.vmem [resolvable:$true] %s306
          %312 = dma.hbm_to_vmem [thread:$0]  %s305, 1024, %s307, %s296, 64, 64, 4
        $region32: #{tpu_custom_call.1} parent=15 // pred_fallthru
          _
        // Predicated region
        $region33: #{tpu_custom_call.1} parent=15 // pred_check
          %p313 = pneg %p160
        $region34: #{tpu_custom_call.1} parent=15 // pred_check_branch
          %315 = sbr.rel (%p313) target = $region36
        $region35: #{tpu_custom_call.1} parent=15 // pred_region
          %p316 = scmp.lt.s32.totalorder %s29, 1
          %s317 = scalar_select %p316, %s29, 1
          %s318 = scalar_lea.vmem %s4, %s317
        $region36: #{tpu_custom_call.1} parent=15 // pred_fallthru
          _
        // Predicated region
        $region37: #{tpu_custom_call.1} parent=15 // pred_check
          %p319 = pneg %p186
        $region38: #{tpu_custom_call.1} parent=15 // pred_check_branch
          %321 = sbr.rel (%p319) target = $region40
        $region39: #{tpu_custom_call.1} parent=15 // pred_region
          %s322 = sand.u32 %s176, 1
          %s323 = scalar_lea.sflag [#allocation6], %s322
          %s324 = sand.u32 %s176, 1
          %s325 = smul.addr %s324, 64
          %s326 = scalar_lea.vmem [#allocation5], %s325
          %s328 = ssub.s32 1024, 1024
          %329 = vsyncadd %s323, %s328
          %s330 = smul.addr %s29, 16
          %s331 = smul.addr %s330, 64
          %s332 = scalar_lea.hbm %s5, %s331
          %s333 = sshll.u32 %s326, 4
          %s334 = int_to_ptr.vmem [resolvable:$true] %s333
          %339 = dma.hbm_to_vmem [thread:$0]  %s332, 1024, %s334, %s323, 64, 64, 4
        $region40: #{tpu_custom_call.1} parent=15 // pred_fallthru
          _
        // Predicated region
        $region41: #{tpu_custom_call.1} parent=15 // pred_check
          %p340 = pneg %p212
        $region42: #{tpu_custom_call.1} parent=15 // pred_check_branch
          %342 = sbr.rel (%p340) target = $region44
        $region43: #{tpu_custom_call.1} parent=15 // pred_region
          %p343 = scmp.lt.s32.totalorder %s29, 1
          %s344 = scalar_select %p343, %s29, 1
          %s345 = scalar_lea.vmem %s6, %s344
        $region44: #{tpu_custom_call.1} parent=15 // pred_fallthru
          _
      $region16: #{tpu_custom_call.1} parent=5 // pred_fallthru
        _
      %p346 = scmp.le.s32.totalorder 1, %s22
      %p347 = scmp.lt.s32.totalorder %s22, 3
      %p348 = pnand %p346, %p347
      %p349 = pneg %p348
      // Predicated region
      $region45: #{tpu_custom_call.1} parent=5 // pred_check
        _
      $region46: #{tpu_custom_call.1} parent=5 // pred_check_branch
        %351 = sbr.rel (%p348) target = $region48
      $region47: #{tpu_custom_call.1} parent=5 // pred_region
        %s352 = ssub.s32 %s22, 1
        %s353 = sand.u32 %s127, 1
        %s354 = scalar_lea.sflag [#allocation3], %s353
        %s355 = sand.u32 %s127, 1
        %s356 = smul.addr %s355, 64
        %s357 = scalar_lea.vmem [#allocation2], %s356
        // Predicated region
        $region49: #{tpu_custom_call.1} parent=47 // pred_check
          %p358 = pneg %p140
        $region50: #{tpu_custom_call.1} parent=47 // pred_check_branch
          %360 = sbr.rel (%p358) target = $region52
        $region51: #{tpu_custom_call.1} parent=47 // pred_region
          %361 = dma.done %s354, 1024
        $region52: #{tpu_custom_call.1} parent=47 // pred_fallthru
          _
        %s362 = sand.u32 %s179, 1
        %s363 = scalar_lea.sflag [#allocation6], %s362
        %s364 = sand.u32 %s179, 1
        %s365 = smul.addr %s364, 64
        %s366 = scalar_lea.vmem [#allocation5], %s365
        // Predicated region
        $region53: #{tpu_custom_call.1} parent=47 // pred_check
          %p367 = pneg %p192
        $region54: #{tpu_custom_call.1} parent=47 // pred_check_branch
          %369 = sbr.rel (%p367) target = $region56
        $region55: #{tpu_custom_call.1} parent=47 // pred_region
          %370 = dma.done %s363, 1024
        $region56: #{tpu_custom_call.1} parent=47 // pred_fallthru
          _
        %s371 = smul.u32 4, %s32
        %p372 = scmp.lt.s32.totalorder %s31, 1
        %s373 = scalar_select %p372, %s31, 1
        %p374 = scmp.lt.s32.totalorder %s371, 3
        %s375 = scalar_select %p374, %s371, 3
        %s376 = smul.addr %s373, 4
        %s377 = sadd.s32 %s375, %s376
        %s378 = smul.addr %s377, 8
        %s379 = scalar_lea.vmem %s0, %s378
        %p380 = pneg %p62
        %p381 = pneg %p59
        %p382 = scmp.lt.s32.totalorder %s31, 1
        %s383 = scalar_select %p382, %s31, 1
        %s384 = smul.addr %s383, 2
        %s385 = smul.addr %s384, 4
        %s386 = scalar_lea.vmem %s1, %s385
        %p387 = pneg %p88
        %p388 = pneg %p85
        %p389 = scmp.lt.s32.totalorder %s31, 1
        %s390 = scalar_select %p389, %s31, 1
        %s391 = scalar_lea.vmem %s2, %s390
        %p392 = pneg %p114
        %p393 = pneg %p111
        %s394 = sand.u32 %s127, 1
        %s395 = scalar_lea.sflag [#allocation3], %s394
        %s396 = sand.u32 %s127, 1
        %s397 = smul.addr %s396, 64
        %s398 = scalar_lea.vmem [#allocation2], %s397
        %p399 = pneg %p140
        %p400 = pneg %p137
        %p401 = scmp.lt.s32.totalorder %s31, 1
        %s402 = scalar_select %p401, %s31, 1
        %s403 = scalar_lea.vmem %s4, %s402
        %p404 = pneg %p166
        %p405 = pneg %p163
        %s406 = sand.u32 %s179, 1
        %s407 = scalar_lea.sflag [#allocation6], %s406
        %s408 = sand.u32 %s179, 1
        %s409 = smul.addr %s408, 64
        %s410 = scalar_lea.vmem [#allocation5], %s409
        %p411 = pneg %p192
        %p412 = pneg %p189
        %p413 = scmp.lt.s32.totalorder %s31, 1
        %s414 = scalar_select %p413, %s31, 1
        %s415 = scalar_lea.vmem %s6, %s414
        %p416 = pneg %p218
        %p417 = pneg %p215
        %p418 = pneg %p246
        %p419 = pneg %p243
        %s420 = sand.u32 %s233, 1
        %s421 = scalar_lea.sflag [#allocation4], %s420
        %s422 = sand.u32 %s233, 1
        %s423 = smul.addr %s422, 32
        %s424 = scalar_lea.vmem [#allocation7], %s423
        %s425 = smul.u32 4, %s32
        %p426 = scmp.lt.s32.totalorder %s31, 1
        %s427 = scalar_select %p426, %s31, 1
        %p428 = scmp.lt.s32.totalorder %s425, 3
        %s429 = scalar_select %p428, %s425, 3
        %s430 = smul.addr %s427, 4
        %s431 = sadd.s32 %s429, %s430
        %s432 = smul.addr %s431, 8
        %s433 = scalar_lea.vmem %s0, %s432
        %s434 = smul.u32 4, %s32
        %p435 = scmp.lt.s32.totalorder %s31, 1
        %s436 = scalar_select %p435, %s31, 1
        %s437 = smul.addr %s436, 2
        %s438 = smul.addr %s437, 4
        %s439 = scalar_lea.vmem %s1, %s438
        %p440 = scmp.lt.s32.totalorder %s31, 1
        %s441 = scalar_select %p440, %s31, 1
        %s442 = scalar_lea.vmem %s2, %s441
        %p443 = scmp.lt.s32.totalorder %s31, 1
        %s444 = scalar_select %p443, %s31, 1
        %s445 = scalar_lea.vmem %s4, %s444
        %p446 = scmp.lt.s32.totalorder %s31, 1
        %s447 = scalar_select %p446, %s31, 1
        %s448 = scalar_lea.vmem %s6, %s447
        %s449 = smul.u32 4, %s32
        %v451 = vld [vmem:[%s433] sm:$0xff]
        %v452 = vld [vmem:[%s433 + $0x8] sm:$0xff]
        %v453 = vld [vmem:[%s433 + $0x10] sm:$0xff]
        %v454 = vld [vmem:[%s433 + $0x18] sm:$0xff]
        %v455 = vpack.c.bf16 %v452, %v451
        %v456 = vpack.c.bf16 %v454, %v453
        %v457 = vld [vmem:[%s439] sm:$0xf]
        %v458 = vld [vmem:[%s439 + $0x4] sm:$0xf]
        %v459 = vld [vmem:[%s442] sm:$0x1]
        %v461 = vlaneseq
        %v462 = vshrl.u32 %v461, 7
        %v463 = vsub.s32 0, %v462
        %v464 = vrot.slane %v459, %v463
        %v468 = vunpack.c.l.b16 %v457
        %v469 = vunpack.c.l.b16 %v458
        %v470 = vpack.c.b16 %v469, %v468
        %vm472 = vcmask 130048
        %v474 = vsel %vm472, %v455, 0
        %v477 = vsel %vm472, %v456, 0
        %479 = vmatprep.subr.bf16.mxu0 0
        %480 = vmatpush1.bf16.msra.mxu0 0
        %481 = vmatprep.subr.bf16.mxu0 0
        %482 = vmatpush1.bf16.msra.mxu0 0
        %483 = vmatprep.subr.bf16.mxu0 0
        %484 = vmatpush1.bf16.msra.mxu0 0
        %485 = vmatprep.subr.bf16.mxu0 0
        %486 = vmatpush1.bf16.msra.mxu0 0
        %487 = vmatprep.subr.bf16.mxu0 0
        %488 = vmatpush1.bf16.msra.mxu0 0
        %489 = vmatprep.subr.bf16.mxu0 0
        %490 = vmatpush1.bf16.msra.mxu0 0
        %491 = vmatprep.subr.bf16.mxu0 0
        %492 = vmatpush1.bf16.msra.mxu0 0
        %493 = vmatprep.subr.bf16.mxu0 0
        %494 = vmatpush1.bf16.msra.mxu0 %v470
        %495 = vmatprep.subr.bf16.mxu0 0
        %496 = vmatpush2.bf16.msra.mxu0 0
        %497 = vmatprep.subr.bf16.mxu0 0
        %498 = vmatpush2.bf16.msra.mxu0 0
        %499 = vmatprep.subr.bf16.mxu0 0
        %500 = vmatpush2.bf16.msra.mxu0 0
        %501 = vmatprep.subr.bf16.mxu0 0
        %502 = vmatpush2.bf16.msra.mxu0 0
        %503 = vmatprep.subr.bf16.mxu0 0
        %504 = vmatpush2.bf16.msra.mxu0 0
        %505 = vmatprep.subr.bf16.mxu0 0
        %506 = vmatpush2.bf16.msra.mxu0 0
        %507 = vmatprep.subr.bf16.mxu0 0
        %508 = vmatpush2.bf16.msra.mxu0 0
        %509 = vmatprep.subr.bf16.mxu0 0
        %510 = vmatpush2.bf16.msra.mxu0 0
        %511 = vmatprep.mubr.bf16.mxu0 0
        %512 = vmatmul.mubr.bf16.gmra.mxu0 %v474
        %v513 = vpop.f32.mrf.mxu0
        %v514 = vadd.f32 %v464, %v513
        %v515 = vpop.f32.mrf.mxu0
        %v516 = vpop.f32.mrf.mxu0
        %v517 = vadd.f32 %v464, %v516
        %v518 = vpop.f32.mrf.mxu0
        %519 = vmatprep.mubr.bf16.mxu0 0
        %520 = vmatmul.mubr.bf16.gmra.mxu0 %v477
        %v521 = vpop.f32.mrf.mxu0
        %v522 = vadd.f32 %v464, %v521
        %v523 = vpop.f32.mrf.mxu0
        %v524 = vpop.f32.mrf.mxu0
        %v525 = vadd.f32 %v464, %v524
        %v526 = vpop.f32.mrf.mxu0
        %527 = vdwg.mxu0
        %v528 = vmax.f32 %v514, 0.0
        %v529 = vmax.f32 %v517, 0.0
        %v530 = vmax.f32 %v522, 0.0
        %v531 = vmax.f32 %v525, 0.0
        %v532 = vpack.c.bf16 %v529, %v528
        %v533 = vpack.c.bf16 %v531, %v530
        %v534 = vld [vmem:[%s357] sm:$0xf]
        %v535 = vld [vmem:[%s357 + $0x4] sm:$0xf]
        %v536 = vld [vmem:[%s357 + $0x8] sm:$0xf]
        %v537 = vld [vmem:[%s357 + $0xc] sm:$0xf]
        %v538 = vld [vmem:[%s357 + $0x10] sm:$0xf]
        %v539 = vld [vmem:[%s357 + $0x14] sm:$0xf]
        %v540 = vld [vmem:[%s357 + $0x18] sm:$0xf]
        %v541 = vld [vmem:[%s357 + $0x1c] sm:$0xf]
        %v542 = vld [vmem:[%s357 + $0x20] sm:$0xf]
        %v543 = vld [vmem:[%s357 + $0x24] sm:$0xf]
        %v544 = vld [vmem:[%s357 + $0x28] sm:$0xf]
        %v545 = vld [vmem:[%s357 + $0x2c] sm:$0xf]
        %v546 = vld [vmem:[%s357 + $0x30] sm:$0xf]
        %v547 = vld [vmem:[%s357 + $0x34] sm:$0xf]
        %v548 = vld [vmem:[%s357 + $0x38] sm:$0xf]
        %v549 = vld [vmem:[%s357 + $0x3c] sm:$0xf]
        %v550 = vld [vmem:[%s445] sm:$0x1]
        %v552 = vlaneseq
        %v553 = vshrl.u32 %v552, 7
        %v554 = vsub.s32 0, %v553
        %v555 = vrot.slane %v550, %v554
        %v573 = vunpack.c.l.b16 %v534
        %v574 = vunpack.c.l.b16 %v535
        %v575 = vunpack.c.l.b16 %v536
        %v576 = vunpack.c.l.b16 %v537
        %v577 = vunpack.c.l.b16 %v538
        %v578 = vunpack.c.l.b16 %v539
        %v579 = vunpack.c.l.b16 %v540
        %v580 = vunpack.c.l.b16 %v541
        %v581 = vunpack.c.l.b16 %v542
        %v582 = vunpack.c.l.b16 %v543
        %v583 = vunpack.c.l.b16 %v544
        %v584 = vunpack.c.l.b16 %v545
        %v585 = vunpack.c.l.b16 %v546
        %v586 = vunpack.c.l.b16 %v547
        %v587 = vunpack.c.l.b16 %v548
        %v588 = vunpack.c.l.b16 %v549
        %v589 = vpack.c.b16 %v574, %v573
        %v590 = vpack.c.b16 %v576, %v575
        %v591 = vpack.c.b16 %v578, %v577
        %v592 = vpack.c.b16 %v580, %v579
        %v593 = vpack.c.b16 %v582, %v581
        %v594 = vpack.c.b16 %v584, %v583
        %v595 = vpack.c.b16 %v586, %v585
        %v596 = vpack.c.b16 %v588, %v587
        %605 = vmatprep.subr.bf16.mxu0 0
        %606 = vmatpush1.bf16.msra.mxu0 %v596
        %607 = vmatprep.subr.bf16.mxu0 0
        %608 = vmatpush1.bf16.msra.mxu0 %v595
        %609 = vmatprep.subr.bf16.mxu0 0
        %610 = vmatpush1.bf16.msra.mxu0 %v594
        %611 = vmatprep.subr.bf16.mxu0 0
        %612 = vmatpush1.bf16.msra.mxu0 %v593
        %613 = vmatprep.subr.bf16.mxu0 0
        %614 = vmatpush1.bf16.msra.mxu0 %v592
        %615 = vmatprep.subr.bf16.mxu0 0
        %616 = vmatpush1.bf16.msra.mxu0 %v591
        %617 = vmatprep.subr.bf16.mxu0 0
        %618 = vmatpush1.bf16.msra.mxu0 %v590
        %619 = vmatprep.subr.bf16.mxu0 0
        %620 = vmatpush1.bf16.msra.mxu0 %v589
        %621 = vmatprep.subr.bf16.mxu0 0
        %622 = vmatpush2.bf16.msra.mxu0 0
        %623 = vmatprep.subr.bf16.mxu0 0
        %624 = vmatpush2.bf16.msra.mxu0 0
        %625 = vmatprep.subr.bf16.mxu0 0
        %626 = vmatpush2.bf16.msra.mxu0 0
        %627 = vmatprep.subr.bf16.mxu0 0
        %628 = vmatpush2.bf16.msra.mxu0 0
        %629 = vmatprep.subr.bf16.mxu0 0
        %630 = vmatpush2.bf16.msra.mxu0 0
        %631 = vmatprep.subr.bf16.mxu0 0
        %632 = vmatpush2.bf16.msra.mxu0 0
        %633 = vmatprep.subr.bf16.mxu0 0
        %634 = vmatpush2.bf16.msra.mxu0 0
        %635 = vmatprep.subr.bf16.mxu0 0
        %636 = vmatpush2.bf16.msra.mxu0 0
        %637 = vmatprep.mubr.bf16.mxu0 0
        %638 = vmatmul.mubr.bf16.gmra.mxu0 %v532
        %v639 = vpop.f32.mrf.mxu0
        %v640 = vadd.f32 %v555, %v639
        %v641 = vpop.f32.mrf.mxu0
        %v642 = vpop.f32.mrf.mxu0
        %v643 = vadd.f32 %v555, %v642
        %v644 = vpop.f32.mrf.mxu0
        %645 = vmatprep.mubr.bf16.mxu0 0
        %646 = vmatmul.mubr.bf16.gmra.mxu0 %v533
        %v647 = vpop.f32.mrf.mxu0
        %v648 = vadd.f32 %v555, %v647
        %v649 = vpop.f32.mrf.mxu0
        %v650 = vpop.f32.mrf.mxu0
        %v651 = vadd.f32 %v555, %v650
        %v652 = vpop.f32.mrf.mxu0
        %653 = vdwg.mxu0
        %v654 = vmax.f32 %v640, 0.0
        %v655 = vmax.f32 %v643, 0.0
        %v656 = vmax.f32 %v648, 0.0
        %v657 = vmax.f32 %v651, 0.0
        %v658 = vpack.c.bf16 %v655, %v654
        %v659 = vpack.c.bf16 %v657, %v656
        %v660 = vld [vmem:[%s366] sm:$0xf]
        %v661 = vld [vmem:[%s366 + $0x4] sm:$0xf]
        %v662 = vld [vmem:[%s366 + $0x8] sm:$0xf]
        %v663 = vld [vmem:[%s366 + $0xc] sm:$0xf]
        %v664 = vld [vmem:[%s366 + $0x10] sm:$0xf]
        %v665 = vld [vmem:[%s366 + $0x14] sm:$0xf]
        %v666 = vld [vmem:[%s366 + $0x18] sm:$0xf]
        %v667 = vld [vmem:[%s366 + $0x1c] sm:$0xf]
        %v668 = vld [vmem:[%s366 + $0x20] sm:$0xf]
        %v669 = vld [vmem:[%s366 + $0x24] sm:$0xf]
        %v670 = vld [vmem:[%s366 + $0x28] sm:$0xf]
        %v671 = vld [vmem:[%s366 + $0x2c] sm:$0xf]
        %v672 = vld [vmem:[%s366 + $0x30] sm:$0xf]
        %v673 = vld [vmem:[%s366 + $0x34] sm:$0xf]
        %v674 = vld [vmem:[%s366 + $0x38] sm:$0xf]
        %v675 = vld [vmem:[%s366 + $0x3c] sm:$0xf]
        %v676 = vld [vmem:[%s448] sm:$0x1]
        %v678 = vlaneseq
        %v679 = vshrl.u32 %v678, 7
        %v680 = vsub.s32 0, %v679
        %v681 = vrot.slane %v676, %v680
        %v699 = vunpack.c.l.b16 %v660
        %v700 = vunpack.c.l.b16 %v661
        %v701 = vunpack.c.l.b16 %v662
        %v702 = vunpack.c.l.b16 %v663
        %v703 = vunpack.c.l.b16 %v664
        %v704 = vunpack.c.l.b16 %v665
        %v705 = vunpack.c.l.b16 %v666
        %v706 = vunpack.c.l.b16 %v667
        %v707 = vunpack.c.l.b16 %v668
        %v708 = vunpack.c.l.b16 %v669
        %v709 = vunpack.c.l.b16 %v670
        %v710 = vunpack.c.l.b16 %v671
        %v711 = vunpack.c.l.b16 %v672
        %v712 = vunpack.c.l.b16 %v673
        %v713 = vunpack.c.l.b16 %v674
        %v714 = vunpack.c.l.b16 %v675
        %v715 = vpack.c.b16 %v700, %v699
        %v716 = vpack.c.b16 %v702, %v701
        %v717 = vpack.c.b16 %v704, %v703
        %v718 = vpack.c.b16 %v706, %v705
        %v719 = vpack.c.b16 %v708, %v707
        %v720 = vpack.c.b16 %v710, %v709
        %v721 = vpack.c.b16 %v712, %v711
        %v722 = vpack.c.b16 %v714, %v713
        %731 = vmatprep.subr.bf16.mxu0 0
        %732 = vmatpush1.bf16.msra.mxu0 %v722
        %733 = vmatprep.subr.bf16.mxu0 0
        %734 = vmatpush1.bf16.msra.mxu0 %v721
        %735 = vmatprep.subr.bf16.mxu0 0
        %736 = vmatpush1.bf16.msra.mxu0 %v720
        %737 = vmatprep.subr.bf16.mxu0 0
        %738 = vmatpush1.bf16.msra.mxu0 %v719
        %739 = vmatprep.subr.bf16.mxu0 0
        %740 = vmatpush1.bf16.msra.mxu0 %v718
        %741 = vmatprep.subr.bf16.mxu0 0
        %742 = vmatpush1.bf16.msra.mxu0 %v717
        %743 = vmatprep.subr.bf16.mxu0 0
        %744 = vmatpush1.bf16.msra.mxu0 %v716
        %745 = vmatprep.subr.bf16.mxu0 0
        %746 = vmatpush1.bf16.msra.mxu0 %v715
        %747 = vmatprep.subr.bf16.mxu0 0
        %748 = vmatpush2.bf16.msra.mxu0 0
        %749 = vmatprep.subr.bf16.mxu0 0
        %750 = vmatpush2.bf16.msra.mxu0 0
        %751 = vmatprep.subr.bf16.mxu0 0
        %752 = vmatpush2.bf16.msra.mxu0 0
        %753 = vmatprep.subr.bf16.mxu0 0
        %754 = vmatpush2.bf16.msra.mxu0 0
        %755 = vmatprep.subr.bf16.mxu0 0
        %756 = vmatpush2.bf16.msra.mxu0 0
        %757 = vmatprep.subr.bf16.mxu0 0
        %758 = vmatpush2.bf16.msra.mxu0 0
        %759 = vmatprep.subr.bf16.mxu0 0
        %760 = vmatpush2.bf16.msra.mxu0 0
        %761 = vmatprep.subr.bf16.mxu0 0
        %762 = vmatpush2.bf16.msra.mxu0 0
        %763 = vmatprep.mubr.bf16.mxu0 0
        %764 = vmatmul.mubr.bf16.gmra.mxu0 %v658
        %v765 = vpop.f32.mrf.mxu0
        %v766 = vadd.f32 %v681, %v765
        %v767 = vpop.f32.mrf.mxu0
        %v768 = vpop.f32.mrf.mxu0
        %v769 = vadd.f32 %v681, %v768
        %v770 = vpop.f32.mrf.mxu0
        %771 = vmatprep.mubr.bf16.mxu0 0
        %772 = vmatmul.mubr.bf16.gmra.mxu0 %v659
        %v773 = vpop.f32.mrf.mxu0
        %v774 = vadd.f32 %v681, %v773
        %v775 = vpop.f32.mrf.mxu0
        %v776 = vpop.f32.mrf.mxu0
        %v777 = vadd.f32 %v681, %v776
        %v778 = vpop.f32.mrf.mxu0
        %779 = vdwg.mxu0
        %780 = vst [vmem:[%s424] sm:$0xff] %v766
        %781 = vst [vmem:[%s424 + $0x8] sm:$0xff] %v769
        %782 = vst [vmem:[%s424 + $0x10] sm:$0xff] %v774
        %783 = vst [vmem:[%s424 + $0x18] sm:$0xff] %v777
        %s784 = sand.u32 %s233, 1
        %s785 = scalar_lea.sflag [#allocation4], %s784
        %s786 = sand.u32 %s233, 1
        %s787 = smul.addr %s786, 32
        %s788 = scalar_lea.vmem [#allocation7], %s787
        // Predicated region
        $region57: #{tpu_custom_call.1} parent=47 // pred_check
          %p789 = pneg %p243
        $region58: #{tpu_custom_call.1} parent=47 // pred_check_branch
          %791 = sbr.rel (%p789) target = $region60
        $region59: #{tpu_custom_call.1} parent=47 // pred_region
          %s792 = smul.u32 4, %s32
          %s794 = ssub.s32 512, 512
          %795 = vsyncadd %s785, %s794
          %s796 = smul.addr %s31, 4
          %s797 = sadd.s32 %s792, %s796
          %s798 = smul.addr %s797, 128
          %s799 = scalar_lea.hbm %s7, %s798
          %s800 = sshll.u32 %s788, 4
          %s801 = int_to_ptr.vmem [resolvable:$true] %s800
          %806 = dma.vmem_to_hbm [thread:$0]  %s801, 512, %s799, %s785, 128, 128, 8
        $region60: #{tpu_custom_call.1} parent=47 // pred_fallthru
          _
      $region48: #{tpu_custom_call.1} parent=5 // pred_fallthru
        _
      %p807 = scmp.le.s32.totalorder 2, %s22
      // Predicated region
      $region61: #{tpu_custom_call.1} parent=5 // pred_check
        %p808 = pneg %p807
      $region62: #{tpu_custom_call.1} parent=5 // pred_check_branch
        %810 = sbr.rel (%p808) target = $region64
      $region63: #{tpu_custom_call.1} parent=5 // pred_region
        %s811 = ssub.s32 %s22, 2
        // Predicated region
        $region65: #{tpu_custom_call.1} parent=63 // pred_check
          %p812 = pneg %p249
        $region66: #{tpu_custom_call.1} parent=63 // pred_check_branch
          %814 = sbr.rel (%p812) target = $region68
        $region67: #{tpu_custom_call.1} parent=63 // pred_region
          %s815 = sand.u32 %s234, 1
          %s816 = scalar_lea.sflag [#allocation4], %s815
          %s817 = sand.u32 %s234, 1
          %s818 = smul.addr %s817, 32
          %s819 = scalar_lea.vmem [#allocation7], %s818
          %820 = dma.done %s816, 512
        $region68: #{tpu_custom_call.1} parent=63 // pred_fallthru
          _
      $region64: #{tpu_custom_call.1} parent=5 // pred_fallthru
        _
    $region6: #{tpu_custom_call.1} parent=1 // loop_footer
      %s26 = sadd.s32 1, %s22
    $region7: #{tpu_custom_call.1} parent=1 // loop_footer_branch
      %21 = sbr.rel target = $region3
    $region8: #{tpu_custom_call.1} parent=1 // loop_exit
      _
    %821 = vsyncpa [#allocation3], 1
    %s822 = scalar_lea.sflag [#allocation3], 1
    %823 = vsyncpa %s822, 1
    %824 = vsyncpa [#allocation6], 1
    %s825 = scalar_lea.sflag [#allocation6], 1
    %826 = vsyncpa %s825, 1
    %827 = vsyncpa [#allocation4], 1
    %s828 = scalar_lea.sflag [#allocation4], 1
    %829 = vsyncpa %s828, 1

</llo_original>
